<compile_context>
chip_gen: v5e
topology: v5e:2x2
jax: 0.10.0
libtpu: 0.0.40
codegen_flags: <defaults>
</compile_context>

<pallas_src>
import functools

import jax
import jax.numpy as jnp
import numpy as np
from jax.experimental import pallas as pl
from jax.experimental.pallas import tpu as pltpu


# ----------------------------------------------------------------------------
# Pallas kernel: fused 1x1 conv (+bias) with per-split lane-dense stores
# ----------------------------------------------------------------------------
def _cblinear_kernel(x_ref, *refs, n_splits):
    # x_ref: (tm, C1)
    # refs:  n_splits weight refs (C1, c_i), n_splits bias refs (1, c_i),
    #        n_splits output refs (tm, c_i)
    w_refs = refs[:n_splits]
    b_refs = refs[n_splits:2 * n_splits]
    out_refs = refs[2 * n_splits:]

    x = x_ref[...]
    for w_ref, b_ref, o_ref in zip(w_refs, b_refs, out_refs):
        y = jnp.dot(x, w_ref[...], preferred_element_type=jnp.float32)
        o_ref[...] = (y + b_ref[...]).astype(o_ref.dtype)


def _round_up(v, m):
    return ((v + m - 1) // m) * m


_VMEM_TM_BUDGET = 36 * 1024 * 1024   # tile-sizing budget (fits v7x's 64 MiB)
_VMEM_LIMIT_CAP = 48 * 1024 * 1024   # scoped-VMEM limit requested from Mosaic


def _choose_tm(M, C1, cout_total, x_bytes, out_bytes):
    """Largest row tile fitting the VMEM budget; >= 2 grid steps when possible."""
    # Per-row streamed VMEM: double-buffered x tile + double-buffered output
    # tiles + the f32 matmul intermediates.
    per_row = 2 * C1 * x_bytes + 2 * cout_total * out_bytes + cout_total * 4
    # Grid-resident VMEM: weight chunks + bias (counted double-buffered to stay
    # conservative even though we request single buffering).
    resident = 2 * C1 * cout_total * x_bytes + 2 * cout_total * 4
    avail = max(_VMEM_TM_BUDGET - resident, 128 * per_row)
    tm = min(1024, avail // per_row)
    tm = max(16, (tm // 16) * 16)           # bf16 sublane packing: multiple of 16
    # v7x shards the "parallel" grid axis across 2 TensorCores: keep at least
    # two grid steps for small / medium feature maps.
    if pl.cdiv(M, tm) < 2:
        tm = max(16, _round_up(pl.cdiv(M, 2), 16))
    return int(tm)


def cblinear_forward(x, w, b, c2s, *, tm=None, compute_dtype=jnp.bfloat16,
                     out_dtype=None):
    """CBLinear forward (1x1 conv + bias + channel split), NHWC layout.

    Args:
      x:   (N, H, W, C1) activation (PyTorch NCHW -> transpose(0, 2, 3, 1)).
      w:   (C1, sum(c2s)) weight (PyTorch conv.weight[:, :, 0, 0].T).
      b:   (sum(c2s),)    bias.
      c2s: tuple of output channel sizes.
      tm:  optional row-tile override (rows of N*H*W per grid step, mult. of 8).
      compute_dtype: dtype fed to the MXU (None -> keep x.dtype). Accumulation
        and the bias add are always f32.
      out_dtype: output dtype (None -> x.dtype).

    Returns:
      tuple of (N, H, W, c2s[i]) arrays (channel split of the conv output).
    """
    N, H, W, C1 = x.shape
    couts = tuple(int(c) for c in c2s)
    cout_total = sum(couts)
    assert w.shape == (C1, cout_total), (w.shape, (C1, cout_total))
    assert b.shape == (cout_total,), b.shape

    if out_dtype is None:
        out_dtype = x.dtype
    if compute_dtype is None:
        compute_dtype = x.dtype

    M = N * H * W
    # In a real network the activation is usually already bf16, so this cast is
    # a no-op (or fuses into the producer); it only adds a pass in isolation.
    x2 = x.reshape(M, C1).astype(compute_dtype)

    # Pre-split weight / bias per output so each in-kernel store goes straight
    # to lane 0 of its own lane-dense output array.
    w_chunks, b_chunks, off = [], [], 0
    for c in couts:
        w_chunks.append(w[:, off:off + c].astype(compute_dtype))
        b_chunks.append(b[off:off + c].astype(jnp.float32).reshape(1, c))
        off += c

    x_bytes = jnp.dtype(compute_dtype).itemsize
    out_bytes = jnp.dtype(out_dtype).itemsize
    if tm is None:
        tm = _choose_tm(M, C1, cout_total, x_bytes, out_bytes)
    grid = (pl.cdiv(M, tm),)

    # Scoped-VMEM request sized to the real buffers with headroom (v5e default
    # is only 16 MiB; stay comfortably under v7x's 64 MiB physical VMEM).
    footprint = (tm * (2 * C1 * x_bytes + 2 * cout_total * out_bytes
                       + cout_total * 4)
                 + 2 * C1 * cout_total * x_bytes + 2 * cout_total * 4)
    vmem_limit = int(min(_VMEM_LIMIT_CAP,
                         max(32 * 1024 * 1024, footprint * 5 // 4)))

    kern = functools.partial(_cblinear_kernel, n_splits=len(couts))
    out_shape = tuple(jax.ShapeDtypeStruct((M, c), out_dtype) for c in couts)
    out_specs = tuple(pl.BlockSpec((tm, c), lambda i: (i, 0)) for c in couts)
    x_spec = pl.BlockSpec((tm, C1), lambda i: (i, 0))

    def _run(weight_pipeline_mode):
        kw = ({} if weight_pipeline_mode is None
              else {"pipeline_mode": weight_pipeline_mode})
        w_specs = [pl.BlockSpec((C1, c), lambda i: (0, 0), **kw) for c in couts]
        b_specs = [pl.BlockSpec((1, c), lambda i: (0, 0), **kw) for c in couts]
        return pl.pallas_call(
            kern,
            out_shape=out_shape,
            grid=grid,
            in_specs=[x_spec] + w_specs + b_specs,
            out_specs=out_specs,
            compiler_params=pltpu.CompilerParams(
                dimension_semantics=("parallel",),
                vmem_limit_bytes=vmem_limit),
        )(x2, *w_chunks, *b_chunks)

    try:
        # Weight / bias index_maps are grid-invariant -> single-buffer them.
        outs = _run(pl.Buffered(1))
    except Exception:
        # Fallback for jax versions where the top-level pallas_call pipeline
        # does not accept an explicit pipeline_mode on a BlockSpec.
        outs = _run(None)

    return tuple(o.reshape(N, H, W, c) for o, c in zip(outs, couts))


# ----------------------------------------------------------------------------
# Pure-JAX reference (for correctness check)
# ----------------------------------------------------------------------------
def ref_forward(x, w, b, c2s):
    y = jnp.einsum("nhwc,cd->nhwd", x, w,
                   precision=jax.lax.Precision.HIGHEST) + b
    outs, off = [], 0
    for c in c2s:
        outs.append(y[..., off:off + c])
        off += c
    return tuple(outs)


# ----------------------------------------------------------------------------
if __name__ == "__main__":
    key = jax.random.PRNGKey(0)

    # Small shapes consistent with the module (NHWC). H=15 so M=480 is not a
    # power of two and the explicit-tm test below hits a partial final block.
    N, H, W, C1 = 2, 15, 16, 32
    c2s = (16, 32, 64)                       # sum(c2s) = 112
    cout_total = sum(c2s)

    kx, kw, kb = jax.random.split(key, 3)
    x = jax.random.normal(kx, (N, H, W, C1), jnp.float32)
    w = jax.random.normal(kw, (C1, cout_total), jnp.float32) / np.sqrt(C1)
    b = 0.1 * jax.random.normal(kb, (cout_total,), jnp.float32)

    # 1) default bf16 data path (auto tm; >= 2 parallel grid steps).
    outs = jax.block_until_ready(cblinear_forward(x, w, b, c2s))
    refs = ref_forward(x.astype(jnp.bfloat16).astype(jnp.float32),
                       w.astype(jnp.bfloat16).astype(jnp.float32), b, c2s)
    for o, r in zip(outs, refs):
        np.testing.assert_allclose(np.asarray(o), np.asarray(r),
                                   atol=1e-3, rtol=1e-3)

    # 2) f32 data path with an explicit tile so the last grid block is partial
    #    (exercises the masked edge block; no wrapper-side pad / trim).
    outs32 = jax.block_until_ready(
        cblinear_forward(x, w, b, c2s, tm=128, compute_dtype=jnp.float32))
    refs32 = ref_forward(x, w, b, c2s)
    for o, r in zip(outs32, refs32):
        np.testing.assert_allclose(np.asarray(o), np.asarray(r),
                                   atol=2e-3, rtol=2e-3)

    print("KERNEL_OK")
</pallas_src>

<mosaic_0001>
module attributes {stable_mosaic.version = 11 : i64} {
  func.func @_cblinear_kernel(%arg0: i32, %arg1: memref<240x32xbf16, #tpu.memory_space<vmem>>, %arg2: memref<32x16xbf16, #tpu.memory_space<vmem>>, %arg3: memref<32x32xbf16, #tpu.memory_space<vmem>>, %arg4: memref<32x64xbf16, #tpu.memory_space<vmem>>, %arg5: memref<1x16xf32, #tpu.memory_space<vmem>>, %arg6: memref<1x32xf32, #tpu.memory_space<vmem>>, %arg7: memref<1x64xf32, #tpu.memory_space<vmem>>, %arg8: memref<240x16xf32, #tpu.memory_space<vmem>>, %arg9: memref<240x32xf32, #tpu.memory_space<vmem>>, %arg10: memref<240x64xf32, #tpu.memory_space<vmem>>) attributes {dimension_semantics = [#tpu.dimension_semantics<parallel>], iteration_bounds = array<i64: 2>, scalar_prefetch = 0 : i64, scratch_operands = 0 : i64, tpu.core_type = #tpu.core_type<tc>, window_params = [{transform_indices = @transform_0, window_bounds = array<i64: 240, 32>}, {pipeline_mode = #tpu.pipeline_mode<synchronous>, transform_indices = @transform_1, window_bounds = array<i64: 32, 16>}, {pipeline_mode = #tpu.pipeline_mode<synchronous>, transform_indices = @transform_2, window_bounds = array<i64: 32, 32>}, {pipeline_mode = #tpu.pipeline_mode<synchronous>, transform_indices = @transform_3, window_bounds = array<i64: 32, 64>}, {pipeline_mode = #tpu.pipeline_mode<synchronous>, transform_indices = @transform_4, window_bounds = array<i64: 1, 16>}, {pipeline_mode = #tpu.pipeline_mode<synchronous>, transform_indices = @transform_5, window_bounds = array<i64: 1, 32>}, {pipeline_mode = #tpu.pipeline_mode<synchronous>, transform_indices = @transform_6, window_bounds = array<i64: 1, 64>}, {transform_indices = @transform_7, window_bounds = array<i64: 240, 16>}, {transform_indices = @transform_8, window_bounds = array<i64: 240, 32>}, {transform_indices = @transform_9, window_bounds = array<i64: 240, 64>}]} {
    %c0 = arith.constant 0 : index
    %c0_0 = arith.constant 0 : index
    %0 = vector.load %arg1[%c0, %c0_0] : memref<240x32xbf16, #tpu.memory_space<vmem>>, vector<240x32xbf16>
    %c0_1 = arith.constant 0 : index
    %c0_2 = arith.constant 0 : index
    %1 = vector.load %arg2[%c0_1, %c0_2] : memref<32x16xbf16, #tpu.memory_space<vmem>>, vector<32x16xbf16>
    %cst = arith.constant dense<0.000000e+00> : vector<240x16xf32>
    %2 = tpu.matmul %0, %1, %cst {dimension_numbers = #tpu.dot_dimension_numbers<[1], [0], [0], [1], [0, 0, 1, 1], [], []>} : vector<240x32xbf16>, vector<32x16xbf16>, vector<240x16xf32> -> vector<240x16xf32>
    %c0_3 = arith.constant 0 : index
    %c0_4 = arith.constant 0 : index
    %3 = vector.load %arg5[%c0_3, %c0_4] : memref<1x16xf32, #tpu.memory_space<vmem>>, vector<1x16xf32>
    %4 = vector.broadcast %3 : vector<1x16xf32> to vector<240x16xf32>
    %5 = arith.addf %2, %4 : vector<240x16xf32>
    %c0_5 = arith.constant 0 : index
    %c0_6 = arith.constant 0 : index
    %6 = vector.load %arg8[%c0_5, %c0_6] : memref<240x16xf32, #tpu.memory_space<vmem>>, vector<240x16xf32>
    tpu.vector_store %arg8[%c0_5, %c0_6], %5 {strides = array<i32>} : memref<240x16xf32, #tpu.memory_space<vmem>>, vector<240x16xf32>,
    %c0_7 = arith.constant 0 : index
    %c0_8 = arith.constant 0 : index
    %7 = vector.load %arg3[%c0_7, %c0_8] : memref<32x32xbf16, #tpu.memory_space<vmem>>, vector<32x32xbf16>
    %cst_9 = arith.constant dense<0.000000e+00> : vector<240x32xf32>
    %8 = tpu.matmul %0, %7, %cst_9 {dimension_numbers = #tpu.dot_dimension_numbers<[1], [0], [0], [1], [0, 0, 1, 1], [], []>} : vector<240x32xbf16>, vector<32x32xbf16>, vector<240x32xf32> -> vector<240x32xf32>
    %c0_10 = arith.constant 0 : index
    %c0_11 = arith.constant 0 : index
    %9 = vector.load %arg6[%c0_10, %c0_11] : memref<1x32xf32, #tpu.memory_space<vmem>>, vector<1x32xf32>
    %10 = vector.broadcast %9 : vector<1x32xf32> to vector<240x32xf32>
    %11 = arith.addf %8, %10 : vector<240x32xf32>
    %c0_12 = arith.constant 0 : index
    %c0_13 = arith.constant 0 : index
    %12 = vector.load %arg9[%c0_12, %c0_13] : memref<240x32xf32, #tpu.memory_space<vmem>>, vector<240x32xf32>
    tpu.vector_store %arg9[%c0_12, %c0_13], %11 {strides = array<i32>} : memref<240x32xf32, #tpu.memory_space<vmem>>, vector<240x32xf32>,
    %c0_14 = arith.constant 0 : index
    %c0_15 = arith.constant 0 : index
    %13 = vector.load %arg4[%c0_14, %c0_15] : memref<32x64xbf16, #tpu.memory_space<vmem>>, vector<32x64xbf16>
    %cst_16 = arith.constant dense<0.000000e+00> : vector<240x64xf32>
    %14 = tpu.matmul %0, %13, %cst_16 {dimension_numbers = #tpu.dot_dimension_numbers<[1], [0], [0], [1], [0, 0, 1, 1], [], []>} : vector<240x32xbf16>, vector<32x64xbf16>, vector<240x64xf32> -> vector<240x64xf32>
    %c0_17 = arith.constant 0 : index
    %c0_18 = arith.constant 0 : index
    %15 = vector.load %arg7[%c0_17, %c0_18] : memref<1x64xf32, #tpu.memory_space<vmem>>, vector<1x64xf32>
    %16 = vector.broadcast %15 : vector<1x64xf32> to vector<240x64xf32>
    %17 = arith.addf %14, %16 : vector<240x64xf32>
    %c0_19 = arith.constant 0 : index
    %c0_20 = arith.constant 0 : index
    %18 = vector.load %arg10[%c0_19, %c0_20] : memref<240x64xf32, #tpu.memory_space<vmem>>, vector<240x64xf32>
    tpu.vector_store %arg10[%c0_19, %c0_20], %17 {strides = array<i32>} : memref<240x64xf32, #tpu.memory_space<vmem>>, vector<240x64xf32>,
    return
  }
  func.func @transform_0(%arg0: i32) -> (i32, i32) {
    %c0_i32 = arith.constant 0 : i32
    %c0_i32_0 = arith.constant 0 : i32
    return %arg0, %c0_i32 : i32, i32
  }
  func.func @transform_1(%arg0: i32) -> (i32, i32) {
    %c0_i32 = arith.constant 0 : i32
    %c0_i32_0 = arith.constant 0 : i32
    %c0_i32_1 = arith.constant 0 : i32
    return %c0_i32, %c0_i32_0 : i32, i32
  }
  func.func @transform_2(%arg0: i32) -> (i32, i32) {
    %c0_i32 = arith.constant 0 : i32
    %c0_i32_0 = arith.constant 0 : i32
    %c0_i32_1 = arith.constant 0 : i32
    return %c0_i32, %c0_i32_0 : i32, i32
  }
  func.func @transform_3(%arg0: i32) -> (i32, i32) {
    %c0_i32 = arith.constant 0 : i32
    %c0_i32_0 = arith.constant 0 : i32
    %c0_i32_1 = arith.constant 0 : i32
    return %c0_i32, %c0_i32_0 : i32, i32
  }
  func.func @transform_4(%arg0: i32) -> (i32, i32) {
    %c0_i32 = arith.constant 0 : i32
    %c0_i32_0 = arith.constant 0 : i32
    %c0_i32_1 = arith.constant 0 : i32
    return %c0_i32, %c0_i32_0 : i32, i32
  }
  func.func @transform_5(%arg0: i32) -> (i32, i32) {
    %c0_i32 = arith.constant 0 : i32
    %c0_i32_0 = arith.constant 0 : i32
    %c0_i32_1 = arith.constant 0 : i32
    return %c0_i32, %c0_i32_0 : i32, i32
  }
  func.func @transform_6(%arg0: i32) -> (i32, i32) {
    %c0_i32 = arith.constant 0 : i32
    %c0_i32_0 = arith.constant 0 : i32
    %c0_i32_1 = arith.constant 0 : i32
    return %c0_i32, %c0_i32_0 : i32, i32
  }
  func.func @transform_7(%arg0: i32) -> (i32, i32) {
    %c0_i32 = arith.constant 0 : i32
    %c0_i32_0 = arith.constant 0 : i32
    return %arg0, %c0_i32 : i32, i32
  }
  func.func @transform_8(%arg0: i32) -> (i32, i32) {
    %c0_i32 = arith.constant 0 : i32
    %c0_i32_0 = arith.constant 0 : i32
    return %arg0, %c0_i32 : i32, i32
  }
  func.func @transform_9(%arg0: i32) -> (i32, i32) {
    %c0_i32 = arith.constant 0 : i32
    %c0_i32_0 = arith.constant 0 : i32
    return %arg0, %c0_i32 : i32, i32
  }
}

module attributes {stable_mosaic.version = 11 : i64} {
  func.func @_cblinear_kernel(%arg0: i32, %arg1: memref<240x32xbf16, #tpu.memory_space<vmem>>, %arg2: memref<32x16xbf16, #tpu.memory_space<vmem>>, %arg3: memref<32x32xbf16, #tpu.memory_space<vmem>>, %arg4: memref<32x64xbf16, #tpu.memory_space<vmem>>, %arg5: memref<1x16xf32, #tpu.memory_space<vmem>>, %arg6: memref<1x32xf32, #tpu.memory_space<vmem>>, %arg7: memref<1x64xf32, #tpu.memory_space<vmem>>, %arg8: memref<240x16xf32, #tpu.memory_space<vmem>>, %arg9: memref<240x32xf32, #tpu.memory_space<vmem>>, %arg10: memref<240x64xf32, #tpu.memory_space<vmem>>) attributes {dimension_semantics = [#tpu.dimension_semantics<parallel>], iteration_bounds = array<i64: 2>, scalar_prefetch = 0 : i64, scratch_operands = 0 : i64, tpu.core_type = #tpu.core_type<tc>, window_params = [{transform_indices = @transform_0, window_bounds = array<i64: 240, 32>}, {pipeline_mode = #tpu.pipeline_mode<synchronous>, transform_indices = @transform_1, window_bounds = array<i64: 32, 16>}, {pipeline_mode = #tpu.pipeline_mode<synchronous>, transform_indices = @transform_2, window_bounds = array<i64: 32, 32>}, {pipeline_mode = #tpu.pipeline_mode<synchronous>, transform_indices = @transform_3, window_bounds = array<i64: 32, 64>}, {pipeline_mode = #tpu.pipeline_mode<synchronous>, transform_indices = @transform_4, window_bounds = array<i64: 1, 16>}, {pipeline_mode = #tpu.pipeline_mode<synchronous>, transform_indices = @transform_5, window_bounds = array<i64: 1, 32>}, {pipeline_mode = #tpu.pipeline_mode<synchronous>, transform_indices = @transform_6, window_bounds = array<i64: 1, 64>}, {transform_indices = @transform_7, window_bounds = array<i64: 240, 16>}, {transform_indices = @transform_8, window_bounds = array<i64: 240, 32>}, {transform_indices = @transform_9, window_bounds = array<i64: 240, 64>}]} {
    %c0 = arith.constant 0 : index
    %c0_0 = arith.constant 0 : index
    %0 = vector.load %arg1[%c0, %c0_0] : memref<240x32xbf16, #tpu.memory_space<vmem>>, vector<240x32xbf16>
    %c0_1 = arith.constant 0 : index
    %c0_2 = arith.constant 0 : index
    %1 = vector.load %arg2[%c0_1, %c0_2] : memref<32x16xbf16, #tpu.memory_space<vmem>>, vector<32x16xbf16>
    %cst = arith.constant dense<0.000000e+00> : vector<240x16xf32>
    %2 = tpu.matmul %0, %1, %cst {dimension_numbers = #tpu.dot_dimension_numbers<[1], [0], [0], [1], [0, 0, 1, 1], [], []>} : vector<240x32xbf16>, vector<32x16xbf16>, vector<240x16xf32> -> vector<240x16xf32>
    %c0_3 = arith.constant 0 : index
    %c0_4 = arith.constant 0 : index
    %3 = vector.load %arg5[%c0_3, %c0_4] : memref<1x16xf32, #tpu.memory_space<vmem>>, vector<1x16xf32>
    %4 = vector.broadcast %3 : vector<1x16xf32> to vector<240x16xf32>
    %5 = arith.addf %2, %4 : vector<240x16xf32>
    %c0_5 = arith.constant 0 : index
    %c0_6 = arith.constant 0 : index
    %6 = vector.load %arg8[%c0_5, %c0_6] : memref<240x16xf32, #tpu.memory_space<vmem>>, vector<240x16xf32>
    tpu.vector_store %arg8[%c0_5, %c0_6], %5 {strides = array<i32>} : memref<240x16xf32, #tpu.memory_space<vmem>>, vector<240x16xf32>,
    %c0_7 = arith.constant 0 : index
    %c0_8 = arith.constant 0 : index
    %7 = vector.load %arg3[%c0_7, %c0_8] : memref<32x32xbf16, #tpu.memory_space<vmem>>, vector<32x32xbf16>
    %cst_9 = arith.constant dense<0.000000e+00> : vector<240x32xf32>
    %8 = tpu.matmul %0, %7, %cst_9 {dimension_numbers = #tpu.dot_dimension_numbers<[1], [0], [0], [1], [0, 0, 1, 1], [], []>} : vector<240x32xbf16>, vector<32x32xbf16>, vector<240x32xf32> -> vector<240x32xf32>
    %c0_10 = arith.constant 0 : index
    %c0_11 = arith.constant 0 : index
    %9 = vector.load %arg6[%c0_10, %c0_11] : memref<1x32xf32, #tpu.memory_space<vmem>>, vector<1x32xf32>
    %10 = vector.broadcast %9 : vector<1x32xf32> to vector<240x32xf32>
    %11 = arith.addf %8, %10 : vector<240x32xf32>
    %c0_12 = arith.constant 0 : index
    %c0_13 = arith.constant 0 : index
    %12 = vector.load %arg9[%c0_12, %c0_13] : memref<240x32xf32, #tpu.memory_space<vmem>>, vector<240x32xf32>
    tpu.vector_store %arg9[%c0_12, %c0_13], %11 {strides = array<i32>} : memref<240x32xf32, #tpu.memory_space<vmem>>, vector<240x32xf32>,
    %c0_14 = arith.constant 0 : index
    %c0_15 = arith.constant 0 : index
    %13 = vector.load %arg4[%c0_14, %c0_15] : memref<32x64xbf16, #tpu.memory_space<vmem>>, vector<32x64xbf16>
    %cst_16 = arith.constant dense<0.000000e+00> : vector<240x64xf32>
    %14 = tpu.matmul %0, %13, %cst_16 {dimension_numbers = #tpu.dot_dimension_numbers<[1], [0], [0], [1], [0, 0, 1, 1], [], []>} : vector<240x32xbf16>, vector<32x64xbf16>, vector<240x64xf32> -> vector<240x64xf32>
    %c0_17 = arith.constant 0 : index
    %c0_18 = arith.constant 0 : index
    %15 = vector.load %arg7[%c0_17, %c0_18] : memref<1x64xf32, #tpu.memory_space<vmem>>, vector<1x64xf32>
    %16 = vector.broadcast %15 : vector<1x64xf32> to vector<240x64xf32>
    %17 = arith.addf %14, %16 : vector<240x64xf32>
    %c0_19 = arith.constant 0 : index
    %c0_20 = arith.constant 0 : index
    %18 = vector.load %arg10[%c0_19, %c0_20] : memref<240x64xf32, #tpu.memory_space<vmem>>, vector<240x64xf32>
    tpu.vector_store %arg10[%c0_19, %c0_20], %17 {strides = array<i32>} : memref<240x64xf32, #tpu.memory_space<vmem>>, vector<240x64xf32>,
    return
  }
  func.func @transform_0(%arg0: i32) -> (i32, i32) {
    %c0_i32 = arith.constant 0 : i32
    %c0_i32_0 = arith.constant 0 : i32
    return %arg0, %c0_i32 : i32, i32
  }
  func.func @transform_1(%arg0: i32) -> (i32, i32) {
    %c0_i32 = arith.constant 0 : i32
    %c0_i32_0 = arith.constant 0 : i32
    %c0_i32_1 = arith.constant 0 : i32
    return %c0_i32, %c0_i32_0 : i32, i32
  }
  func.func @transform_2(%arg0: i32) -> (i32, i32) {
    %c0_i32 = arith.constant 0 : i32
    %c0_i32_0 = arith.constant 0 : i32
    %c0_i32_1 = arith.constant 0 : i32
    return %c0_i32, %c0_i32_0 : i32, i32
  }
  func.func @transform_3(%arg0: i32) -> (i32, i32) {
    %c0_i32 = arith.constant 0 : i32
    %c0_i32_0 = arith.constant 0 : i32
    %c0_i32_1 = arith.constant 0 : i32
    return %c0_i32, %c0_i32_0 : i32, i32
  }
  func.func @transform_4(%arg0: i32) -> (i32, i32) {
    %c0_i32 = arith.constant 0 : i32
    %c0_i32_0 = arith.constant 0 : i32
    %c0_i32_1 = arith.constant 0 : i32
    return %c0_i32, %c0_i32_0 : i32, i32
  }
  func.func @transform_5(%arg0: i32) -> (i32, i32) {
    %c0_i32 = arith.constant 0 : i32
    %c0_i32_0 = arith.constant 0 : i32
    %c0_i32_1 = arith.constant 0 : i32
    return %c0_i32, %c0_i32_0 : i32, i32
  }
  func.func @transform_6(%arg0: i32) -> (i32, i32) {
    %c0_i32 = arith.constant 0 : i32
    %c0_i32_0 = arith.constant 0 : i32
    %c0_i32_1 = arith.constant 0 : i32
    return %c0_i32, %c0_i32_0 : i32, i32
  }
  func.func @transform_7(%arg0: i32) -> (i32, i32) {
    %c0_i32 = arith.constant 0 : i32
    %c0_i32_0 = arith.constant 0 : i32
    return %arg0, %c0_i32 : i32, i32
  }
  func.func @transform_8(%arg0: i32) -> (i32, i32) {
    %c0_i32 = arith.constant 0 : i32
    %c0_i32_0 = arith.constant 0 : i32
    return %arg0, %c0_i32 : i32, i32
  }
  func.func @transform_9(%arg0: i32) -> (i32, i32) {
    %c0_i32 = arith.constant 0 : i32
    %c0_i32_0 = arith.constant 0 : i32
    return %arg0, %c0_i32 : i32, i32
  }
}

</mosaic_0001>

<llo_original>
// kernel: tpu_custom_call.1
$region0: #{tpu_custom_call.1}
  #allocation0 [shape = 'u32[]', space=smem, size = 0x4, offset = 0x4, fixed_abs, tag = 'smem constant byte address 0x4 - core index']
  #allocation1 [shape = 'u32[72,128]{1,0:T(1,128)}', space=vmem, size = 0x9000, scoped, tag = 'internal scratch']
  %s0 = inlined_call_operand.vmem [shape: bf16[480,32], index: 0, kind: input, shape index: {}]
  %s1 = inlined_call_operand.vmem [shape: bf16[32,16], index: 1, kind: input, shape index: {}]
  %s2 = inlined_call_operand.vmem [shape: bf16[32,32], index: 2, kind: input, shape index: {}]
  %s3 = inlined_call_operand.vmem [shape: bf16[32,64], index: 3, kind: input, shape index: {}]
  %s4 = inlined_call_operand.vmem [shape: f32[1,16], index: 4, kind: input, shape index: {}]
  %s5 = inlined_call_operand.vmem [shape: f32[1,32], index: 5, kind: input, shape index: {}]
  %s6 = inlined_call_operand.vmem [shape: f32[1,64], index: 6, kind: input, shape index: {}]
  %s7 = inlined_call_operand.vmem [shape: f32[480,16], index: 7, kind: output, shape index: {0}]
  %s8 = inlined_call_operand.vmem [shape: f32[480,32], index: 8, kind: output, shape index: {1}]
  %s9 = inlined_call_operand.vmem [shape: f32[480,64], index: 9, kind: output, shape index: {2}]
  %10 = xla_tuple %s7, %s8, %s9
  %s11 = sld [smem:[#allocation0]]
  $region77: #{tpu_custom_call.1} parent=0
    _
  %s13 = ssub.s32 1, %s11
  %s14 = scalar_select 0, %s13, %s11
  loop: start=0, step=1, limit=4
  $region2: #{tpu_custom_call.1} parent=0 // loop_pre_header
    _
  $region3: #{tpu_custom_call.1} parent=0 // loop_header
    %s16 = sphi 0, %s20
    %p17 = scmp.ge.s32.totalorder %s16, 4
    %s26 = sphi 0, %s28
    %s29 = sphi 0, %s26
    %s30 = sphi 0, %s29
    %s46 = sphi 0, %s30
    %s50 = sphi 0, %s50
    %s52 = sphi 0, %s50
    %s53 = sphi 0, %s52
    %s67 = sphi 0, %s53
    %s71 = sphi 0, %s71
    %s73 = sphi 0, %s71
    %s74 = sphi 0, %s73
    %s88 = sphi 0, %s74
    %s92 = sphi 0, %s92
    %s94 = sphi 0, %s92
    %s95 = sphi 0, %s94
    %s109 = sphi 0, %s95
    %s113 = sphi 0, %s113
    %s115 = sphi 0, %s113
    %s116 = sphi 0, %s115
    %s130 = sphi 0, %s116
    %s134 = sphi 0, %s134
    %s136 = sphi 0, %s134
    %s137 = sphi 0, %s136
    %s151 = sphi 0, %s137
    %s155 = sphi 0, %s155
    %s157 = sphi 0, %s155
    %s158 = sphi 0, %s157
    %s172 = sphi 0, %s158
    %s178 = sphi 0, %s180
    %s181 = sphi 0, %s178
    %s182 = sphi 0, %s181
    %s198 = sphi 0, %s182
    %s204 = sphi 0, %s206
    %s207 = sphi 0, %s204
    %s208 = sphi 0, %s207
    %s224 = sphi 0, %s208
    %s230 = sphi 0, %s232
    %s233 = sphi 0, %s230
    %s234 = sphi 0, %s233
    %s250 = sphi 0, %s234
  $region4: #{tpu_custom_call.1} parent=0 // loop_header_branch
    %19 = sbr.rel (%p17) target = $region8
  $region5: #{tpu_custom_call.1} parent=0 // loop_body
    %s21 = ssub.s32 %s16, 1
    %s22 = ssub.s32 %s16, 2
    %s23 = sadd.s32 %s16, 1
    %s24 = ssub.s32 %s16, %s23
    %p25 = scmp.eq.s32.totalorder %s24, 0
    %s27 = sadd.s32 %s26, 1
    %s28 = scalar_select %p25, %s26, %s27
    %p31 = pneg %p25
    %p32 = scmp.eq.s32.totalorder %s16, 1
    %p33 = por %p31, %p32
    %p34 = scmp.ne.s32.totalorder %s26, %s29
    %p35 = scmp.eq.s32.totalorder %s16, 0
    %p36 = por %p34, %p35
    %p37 = scmp.ne.s32.totalorder %s26, %s29
    %p38 = scmp.eq.s32.totalorder %s21, 1
    %p39 = por %p37, %p38
    %p40 = scmp.ne.s32.totalorder %s29, %s30
    %p41 = scmp.eq.s32.totalorder %s21, 0
    %p42 = por %p40, %p41
    %p43 = scmp.ne.s32.totalorder %s29, %s30
    %p44 = scmp.eq.s32.totalorder %s22, 1
    %p45 = por %p43, %p44
    %p47 = scmp.ne.s32.totalorder %s30, %s46
    %p48 = scmp.eq.s32.totalorder %s22, 0
    %p49 = por %p47, %p48
    %s51 = sadd.s32 %s50, 1
    %p54 = scmp.eq.s32.totalorder %s16, 1
    %p55 = scmp.ne.s32.totalorder %s50, %s52
    %p56 = scmp.eq.s32.totalorder %s16, 0
    %p57 = por %p55, %p56
    %p58 = scmp.ne.s32.totalorder %s50, %s52
    %p59 = scmp.eq.s32.totalorder %s21, 1
    %p60 = por %p58, %p59
    %p61 = scmp.ne.s32.totalorder %s52, %s53
    %p62 = scmp.eq.s32.totalorder %s21, 0
    %p63 = por %p61, %p62
    %p64 = scmp.ne.s32.totalorder %s52, %s53
    %p65 = scmp.eq.s32.totalorder %s22, 1
    %p66 = por %p64, %p65
    %p68 = scmp.ne.s32.totalorder %s53, %s67
    %p69 = scmp.eq.s32.totalorder %s22, 0
    %p70 = por %p68, %p69
    %s72 = sadd.s32 %s71, 1
    %p75 = scmp.eq.s32.totalorder %s16, 1
    %p76 = scmp.ne.s32.totalorder %s71, %s73
    %p77 = scmp.eq.s32.totalorder %s16, 0
    %p78 = por %p76, %p77
    %p79 = scmp.ne.s32.totalorder %s71, %s73
    %p80 = scmp.eq.s32.totalorder %s21, 1
    %p81 = por %p79, %p80
    %p82 = scmp.ne.s32.totalorder %s73, %s74
    %p83 = scmp.eq.s32.totalorder %s21, 0
    %p84 = por %p82, %p83
    %p85 = scmp.ne.s32.totalorder %s73, %s74
    %p86 = scmp.eq.s32.totalorder %s22, 1
    %p87 = por %p85, %p86
    %p89 = scmp.ne.s32.totalorder %s74, %s88
    %p90 = scmp.eq.s32.totalorder %s22, 0
    %p91 = por %p89, %p90
    %s93 = sadd.s32 %s92, 1
    %p96 = scmp.eq.s32.totalorder %s16, 1
    %p97 = scmp.ne.s32.totalorder %s92, %s94
    %p98 = scmp.eq.s32.totalorder %s16, 0
    %p99 = por %p97, %p98
    %p100 = scmp.ne.s32.totalorder %s92, %s94
    %p101 = scmp.eq.s32.totalorder %s21, 1
    %p102 = por %p100, %p101
    %p103 = scmp.ne.s32.totalorder %s94, %s95
    %p104 = scmp.eq.s32.totalorder %s21, 0
    %p105 = por %p103, %p104
    %p106 = scmp.ne.s32.totalorder %s94, %s95
    %p107 = scmp.eq.s32.totalorder %s22, 1
    %p108 = por %p106, %p107
    %p110 = scmp.ne.s32.totalorder %s95, %s109
    %p111 = scmp.eq.s32.totalorder %s22, 0
    %p112 = por %p110, %p111
    %s114 = sadd.s32 %s113, 1
    %p117 = scmp.eq.s32.totalorder %s16, 1
    %p118 = scmp.ne.s32.totalorder %s113, %s115
    %p119 = scmp.eq.s32.totalorder %s16, 0
    %p120 = por %p118, %p119
    %p121 = scmp.ne.s32.totalorder %s113, %s115
    %p122 = scmp.eq.s32.totalorder %s21, 1
    %p123 = por %p121, %p122
    %p124 = scmp.ne.s32.totalorder %s115, %s116
    %p125 = scmp.eq.s32.totalorder %s21, 0
    %p126 = por %p124, %p125
    %p127 = scmp.ne.s32.totalorder %s115, %s116
    %p128 = scmp.eq.s32.totalorder %s22, 1
    %p129 = por %p127, %p128
    %p131 = scmp.ne.s32.totalorder %s116, %s130
    %p132 = scmp.eq.s32.totalorder %s22, 0
    %p133 = por %p131, %p132
    %s135 = sadd.s32 %s134, 1
    %p138 = scmp.eq.s32.totalorder %s16, 1
    %p139 = scmp.ne.s32.totalorder %s134, %s136
    %p140 = scmp.eq.s32.totalorder %s16, 0
    %p141 = por %p139, %p140
    %p142 = scmp.ne.s32.totalorder %s134, %s136
    %p143 = scmp.eq.s32.totalorder %s21, 1
    %p144 = por %p142, %p143
    %p145 = scmp.ne.s32.totalorder %s136, %s137
    %p146 = scmp.eq.s32.totalorder %s21, 0
    %p147 = por %p145, %p146
    %p148 = scmp.ne.s32.totalorder %s136, %s137
    %p149 = scmp.eq.s32.totalorder %s22, 1
    %p150 = por %p148, %p149
    %p152 = scmp.ne.s32.totalorder %s137, %s151
    %p153 = scmp.eq.s32.totalorder %s22, 0
    %p154 = por %p152, %p153
    %s156 = sadd.s32 %s155, 1
    %p159 = scmp.eq.s32.totalorder %s16, 1
    %p160 = scmp.ne.s32.totalorder %s155, %s157
    %p161 = scmp.eq.s32.totalorder %s16, 0
    %p162 = por %p160, %p161
    %p163 = scmp.ne.s32.totalorder %s155, %s157
    %p164 = scmp.eq.s32.totalorder %s21, 1
    %p165 = por %p163, %p164
    %p166 = scmp.ne.s32.totalorder %s157, %s158
    %p167 = scmp.eq.s32.totalorder %s21, 0
    %p168 = por %p166, %p167
    %p169 = scmp.ne.s32.totalorder %s157, %s158
    %p170 = scmp.eq.s32.totalorder %s22, 1
    %p171 = por %p169, %p170
    %p173 = scmp.ne.s32.totalorder %s158, %s172
    %p174 = scmp.eq.s32.totalorder %s22, 0
    %p175 = por %p173, %p174
    %s176 = ssub.s32 %s16, %s23
    %p177 = scmp.eq.s32.totalorder %s176, 0
    %s179 = sadd.s32 %s178, 1
    %s180 = scalar_select %p177, %s178, %s179
    %p183 = pneg %p177
    %p184 = scmp.eq.s32.totalorder %s16, 1
    %p185 = por %p183, %p184
    %p186 = scmp.ne.s32.totalorder %s178, %s181
    %p187 = scmp.eq.s32.totalorder %s16, 0
    %p188 = por %p186, %p187
    %p189 = scmp.ne.s32.totalorder %s178, %s181
    %p190 = scmp.eq.s32.totalorder %s21, 1
    %p191 = por %p189, %p190
    %p192 = scmp.ne.s32.totalorder %s181, %s182
    %p193 = scmp.eq.s32.totalorder %s21, 0
    %p194 = por %p192, %p193
    %p195 = scmp.ne.s32.totalorder %s181, %s182
    %p196 = scmp.eq.s32.totalorder %s22, 1
    %p197 = por %p195, %p196
    %p199 = scmp.ne.s32.totalorder %s182, %s198
    %p200 = scmp.eq.s32.totalorder %s22, 0
    %p201 = por %p199, %p200
    %s202 = ssub.s32 %s16, %s23
    %p203 = scmp.eq.s32.totalorder %s202, 0
    %s205 = sadd.s32 %s204, 1
    %s206 = scalar_select %p203, %s204, %s205
    %p209 = pneg %p203
    %p210 = scmp.eq.s32.totalorder %s16, 1
    %p211 = por %p209, %p210
    %p212 = scmp.ne.s32.totalorder %s204, %s207
    %p213 = scmp.eq.s32.totalorder %s16, 0
    %p214 = por %p212, %p213
    %p215 = scmp.ne.s32.totalorder %s204, %s207
    %p216 = scmp.eq.s32.totalorder %s21, 1
    %p217 = por %p215, %p216
    %p218 = scmp.ne.s32.totalorder %s207, %s208
    %p219 = scmp.eq.s32.totalorder %s21, 0
    %p220 = por %p218, %p219
    %p221 = scmp.ne.s32.totalorder %s207, %s208
    %p222 = scmp.eq.s32.totalorder %s22, 1
    %p223 = por %p221, %p222
    %p225 = scmp.ne.s32.totalorder %s208, %s224
    %p226 = scmp.eq.s32.totalorder %s22, 0
    %p227 = por %p225, %p226
    %s228 = ssub.s32 %s16, %s23
    %p229 = scmp.eq.s32.totalorder %s228, 0
    %s231 = sadd.s32 %s230, 1
    %s232 = scalar_select %p229, %s230, %s231
    %p235 = pneg %p229
    %p236 = scmp.eq.s32.totalorder %s16, 1
    %p237 = por %p235, %p236
    %p238 = scmp.ne.s32.totalorder %s230, %s233
    %p239 = scmp.eq.s32.totalorder %s16, 0
    %p240 = por %p238, %p239
    %p241 = scmp.ne.s32.totalorder %s230, %s233
    %p242 = scmp.eq.s32.totalorder %s21, 1
    %p243 = por %p241, %p242
    %p244 = scmp.ne.s32.totalorder %s233, %s234
    %p245 = scmp.eq.s32.totalorder %s21, 0
    %p246 = por %p244, %p245
    %p247 = scmp.ne.s32.totalorder %s233, %s234
    %p248 = scmp.eq.s32.totalorder %s22, 1
    %p249 = por %p247, %p248
    %p251 = scmp.ne.s32.totalorder %s234, %s250
    %p252 = scmp.eq.s32.totalorder %s22, 0
    %p253 = por %p251, %p252
    %p254 = scmp.le.s32.totalorder 1, %s16
    %p255 = scmp.lt.s32.totalorder %s16, 3
    %p256 = pnand %p254, %p255
    %p257 = pneg %p256
    // Predicated region
    $region9: #{tpu_custom_call.1} parent=5 // pred_check
      _
    $region10: #{tpu_custom_call.1} parent=5 // pred_check_branch
      %259 = sbr.rel (%p256) target = $region12
    $region11: #{tpu_custom_call.1} parent=5 // pred_region
      %s260 = ssub.s32 %s16, 1
      // Predicated region
      $region13: #{tpu_custom_call.1} parent=11 // pred_check
        %p261 = pneg %p63
      $region14: #{tpu_custom_call.1} parent=11 // pred_check_branch
        %263 = sbr.rel (%p261) target = $region16
      $region15: #{tpu_custom_call.1} parent=11 // pred_region
        _
      $region16: #{tpu_custom_call.1} parent=11 // pred_fallthru
        _
      // Predicated region
      $region17: #{tpu_custom_call.1} parent=11 // pred_check
        %p264 = pneg %p84
      $region18: #{tpu_custom_call.1} parent=11 // pred_check_branch
        %266 = sbr.rel (%p264) target = $region20
      $region19: #{tpu_custom_call.1} parent=11 // pred_region
        _
      $region20: #{tpu_custom_call.1} parent=11 // pred_fallthru
        _
      // Predicated region
      $region21: #{tpu_custom_call.1} parent=11 // pred_check
        %p267 = pneg %p105
      $region22: #{tpu_custom_call.1} parent=11 // pred_check_branch
        %269 = sbr.rel (%p267) target = $region24
      $region23: #{tpu_custom_call.1} parent=11 // pred_region
        _
      $region24: #{tpu_custom_call.1} parent=11 // pred_fallthru
        _
      // Predicated region
      $region25: #{tpu_custom_call.1} parent=11 // pred_check
        %p270 = pneg %p126
      $region26: #{tpu_custom_call.1} parent=11 // pred_check_branch
        %272 = sbr.rel (%p270) target = $region28
      $region27: #{tpu_custom_call.1} parent=11 // pred_region
        _
      $region28: #{tpu_custom_call.1} parent=11 // pred_fallthru
        _
      // Predicated region
      $region29: #{tpu_custom_call.1} parent=11 // pred_check
        %p273 = pneg %p147
      $region30: #{tpu_custom_call.1} parent=11 // pred_check_branch
        %275 = sbr.rel (%p273) target = $region32
      $region31: #{tpu_custom_call.1} parent=11 // pred_region
        _
      $region32: #{tpu_custom_call.1} parent=11 // pred_fallthru
        _
      // Predicated region
      $region33: #{tpu_custom_call.1} parent=11 // pred_check
        %p276 = pneg %p168
      $region34: #{tpu_custom_call.1} parent=11 // pred_check_branch
        %278 = sbr.rel (%p276) target = $region36
      $region35: #{tpu_custom_call.1} parent=11 // pred_region
        _
      $region36: #{tpu_custom_call.1} parent=11 // pred_fallthru
        _
    $region12: #{tpu_custom_call.1} parent=5 // pred_fallthru
      _
    %p279 = scmp.lt.s32.totalorder %s16, 2
    // Predicated region
    $region37: #{tpu_custom_call.1} parent=5 // pred_check
      %p280 = pneg %p279
    $region38: #{tpu_custom_call.1} parent=5 // pred_check_branch
      %282 = sbr.rel (%p280) target = $region40
    $region39: #{tpu_custom_call.1} parent=5 // pred_region
      // Predicated region
      $region41: #{tpu_custom_call.1} parent=39 // pred_check
        %p283 = pneg %p36
      $region42: #{tpu_custom_call.1} parent=39 // pred_check_branch
        %285 = sbr.rel (%p283) target = $region44
      $region43: #{tpu_custom_call.1} parent=39 // pred_region
        %s286 = smul.u32 30, %s16
        %p287 = scmp.lt.s32.totalorder %s286, 59
        %s288 = scalar_select %p287, %s286, 59
        %s289 = smul.addr %s288, 4
        %s290 = scalar_lea.vmem %s0, %s289
        %s291 = smul.u32 30, %s16
      $region44: #{tpu_custom_call.1} parent=39 // pred_fallthru
        _
    $region40: #{tpu_custom_call.1} parent=5 // pred_fallthru
      _
    %p292 = scmp.le.s32.totalorder 1, %s16
    %p293 = scmp.lt.s32.totalorder %s16, 3
    %p294 = pnand %p292, %p293
    %p295 = pneg %p294
    // Predicated region
    $region45: #{tpu_custom_call.1} parent=5 // pred_check
      _
    $region46: #{tpu_custom_call.1} parent=5 // pred_check_branch
      %297 = sbr.rel (%p294) target = $region48
    $region47: #{tpu_custom_call.1} parent=5 // pred_region
      %s298 = ssub.s32 %s16, 1
      %s299 = smul.u32 30, %s21
      %p300 = scmp.lt.s32.totalorder %s299, 59
      %s301 = scalar_select %p300, %s299, 59
      %s302 = smul.addr %s301, 4
      %s303 = scalar_lea.vmem %s0, %s302
      %p304 = pneg %p42
      %p305 = pneg %p39
      %p306 = pneg %p63
      %p307 = pneg %p60
      %p308 = pneg %p84
      %p309 = pneg %p81
      %p310 = pneg %p105
      %p311 = pneg %p102
      %p312 = pneg %p126
      %p313 = pneg %p123
      %p314 = pneg %p147
      %p315 = pneg %p144
      %p316 = pneg %p168
      %p317 = pneg %p165
      %p318 = pneg %p194
      %p319 = pneg %p191
      %s320 = smul.u32 30, %s21
      %p321 = scmp.lt.s32.totalorder %s320, 59
      %s322 = scalar_select %p321, %s320, 59
      %s323 = smul.addr %s322, 8
      %s324 = scalar_lea.vmem %s7, %s323
      %p325 = pneg %p220
      %p326 = pneg %p217
      %s327 = smul.u32 30, %s21
      %p328 = scmp.lt.s32.totalorder %s327, 59
      %s329 = scalar_select %p328, %s327, 59
      %s330 = smul.addr %s329, 8
      %s331 = scalar_lea.vmem %s8, %s330
      %p332 = pneg %p246
      %p333 = pneg %p243
      %s334 = smul.u32 30, %s21
      %p335 = scmp.lt.s32.totalorder %s334, 59
      %s336 = scalar_select %p335, %s334, 59
      %s337 = smul.addr %s336, 8
      %s338 = scalar_lea.vmem %s9, %s337
      %s339 = smul.u32 30, %s21
      %p340 = scmp.lt.s32.totalorder %s339, 59
      %s341 = scalar_select %p340, %s339, 59
      %s342 = smul.addr %s341, 4
      %s343 = scalar_lea.vmem %s0, %s342
      %s344 = smul.u32 30, %s21
      %s345 = smul.u32 30, %s21
      %p346 = scmp.lt.s32.totalorder %s345, 59
      %s347 = scalar_select %p346, %s345, 59
      %s348 = smul.addr %s347, 8
      %s349 = scalar_lea.vmem %s7, %s348
      %s350 = smul.u32 30, %s21
      %s351 = smul.u32 30, %s21
      %p352 = scmp.lt.s32.totalorder %s351, 59
      %s353 = scalar_select %p352, %s351, 59
      %s354 = smul.addr %s353, 8
      %s355 = scalar_lea.vmem %s8, %s354
      %s356 = smul.u32 30, %s21
      %s357 = smul.u32 30, %s21
      %p358 = scmp.lt.s32.totalorder %s357, 59
      %s359 = scalar_select %p358, %s357, 59
      %s360 = smul.addr %s359, 8
      %s361 = scalar_lea.vmem %s9, %s360
      %s362 = smul.u32 30, %s21
      %v364 = vld [vmem:[%s343] sm:$0xf]
      %v365 = vld [vmem:[%s343 + $0x4] sm:$0xf]
      %v366 = vld [vmem:[%s343 + $0x8] sm:$0xf]
      %v367 = vld [vmem:[%s343 + $0xc] sm:$0xf]
      %v368 = vld [vmem:[%s343 + $0x10] sm:$0xf]
      %v369 = vld [vmem:[%s343 + $0x14] sm:$0xf]
      %v370 = vld [vmem:[%s343 + $0x18] sm:$0xf]
      %v371 = vld [vmem:[%s343 + $0x1c] sm:$0xf]
      %v372 = vld [vmem:[%s343 + $0x20] sm:$0xf]
      %v373 = vld [vmem:[%s343 + $0x24] sm:$0xf]
      %v374 = vld [vmem:[%s343 + $0x28] sm:$0xf]
      %v375 = vld [vmem:[%s343 + $0x2c] sm:$0xf]
      %v376 = vld [vmem:[%s343 + $0x30] sm:$0xf]
      %v377 = vld [vmem:[%s343 + $0x34] sm:$0xf]
      %v378 = vld [vmem:[%s343 + $0x38] sm:$0xf]
      %v379 = vld [vmem:[%s343 + $0x3c] sm:$0xf]
      %v380 = vld [vmem:[%s343 + $0x40] sm:$0xf]
      %v381 = vld [vmem:[%s343 + $0x44] sm:$0xf]
      %v382 = vld [vmem:[%s343 + $0x48] sm:$0xf]
      %v383 = vld [vmem:[%s343 + $0x4c] sm:$0xf]
      %v384 = vld [vmem:[%s343 + $0x50] sm:$0xf]
      %v385 = vld [vmem:[%s343 + $0x54] sm:$0xf]
      %v386 = vld [vmem:[%s343 + $0x58] sm:$0xf]
      %v387 = vld [vmem:[%s343 + $0x5c] sm:$0xf]
      %v388 = vld [vmem:[%s343 + $0x60] sm:$0xf]
      %v389 = vld [vmem:[%s343 + $0x64] sm:$0xf]
      %v390 = vld [vmem:[%s343 + $0x68] sm:$0xf]
      %v391 = vld [vmem:[%s343 + $0x6c] sm:$0xf]
      %v392 = vld [vmem:[%s343 + $0x70] sm:$0xf]
      %v393 = vld [vmem:[%s343 + $0x74] sm:$0xf]
      %v394 = vld [vmem:[%s1] sm:$0xf]
      %v395 = vld [vmem:[%s1 + $0x4] sm:$0xf]
      %v396 = vld [vmem:[%s1 + $0x8] sm:$0xf]
      %v397 = vld [vmem:[%s1 + $0xc] sm:$0xf]
      %v398 = vld [vmem:[%s4] sm:$0x1]
      %v400 = vperm.slane %v398, 0
      %v432 = vunpack.c.l.b16 %v364
      %v433 = vunpack.c.l.b16 %v365
      %v434 = vunpack.c.l.b16 %v366
      %v435 = vunpack.c.l.b16 %v367
      %v436 = vunpack.c.l.b16 %v368
      %v437 = vunpack.c.l.b16 %v369
      %v438 = vunpack.c.l.b16 %v370
      %v439 = vunpack.c.l.b16 %v371
      %v440 = vunpack.c.l.b16 %v372
      %v441 = vunpack.c.l.b16 %v373
      %v442 = vunpack.c.l.b16 %v374
      %v443 = vunpack.c.l.b16 %v375
      %v444 = vunpack.c.l.b16 %v376
      %v445 = vunpack.c.l.b16 %v377
      %v446 = vunpack.c.l.b16 %v378
      %v447 = vunpack.c.l.b16 %v379
      %v448 = vunpack.c.l.b16 %v380
      %v449 = vunpack.c.l.b16 %v381
      %v450 = vunpack.c.l.b16 %v382
      %v451 = vunpack.c.l.b16 %v383
      %v452 = vunpack.c.l.b16 %v384
      %v453 = vunpack.c.l.b16 %v385
      %v454 = vunpack.c.l.b16 %v386
      %v455 = vunpack.c.l.b16 %v387
      %v456 = vunpack.c.l.b16 %v388
      %v457 = vunpack.c.l.b16 %v389
      %v458 = vunpack.c.l.b16 %v390
      %v459 = vunpack.c.l.b16 %v391
      %v460 = vunpack.c.l.b16 %v392
      %v461 = vunpack.c.l.b16 %v393
      %v462 = vpack.c.b16 %v433, %v432
      %v463 = vpack.c.b16 %v435, %v434
      %v464 = vpack.c.b16 %v437, %v436
      %v465 = vpack.c.b16 %v439, %v438
      %v466 = vpack.c.b16 %v441, %v440
      %v467 = vpack.c.b16 %v443, %v442
      %v468 = vpack.c.b16 %v445, %v444
      %v469 = vpack.c.b16 %v447, %v446
      %v470 = vpack.c.b16 %v449, %v448
      %v471 = vpack.c.b16 %v451, %v450
      %v472 = vpack.c.b16 %v453, %v452
      %v473 = vpack.c.b16 %v455, %v454
      %v474 = vpack.c.b16 %v457, %v456
      %v475 = vpack.c.b16 %v459, %v458
      %v476 = vpack.c.b16 %v461, %v460
      %v481 = vunpack.c.l.b16 %v394
      %v482 = vunpack.c.l.b16 %v395
      %v483 = vunpack.c.l.b16 %v396
      %v484 = vunpack.c.l.b16 %v397
      %v485 = vpack.c.b16 %v482, %v481
      %v486 = vpack.c.b16 %v484, %v483
      %vm489 = vcmask 261120
      %v491 = vsel %vm489, %v462, 0
      %v494 = vsel %vm489, %v463, 0
      %v497 = vsel %vm489, %v464, 0
      %v500 = vsel %vm489, %v465, 0
      %v503 = vsel %vm489, %v466, 0
      %v506 = vsel %vm489, %v467, 0
      %v509 = vsel %vm489, %v468, 0
      %v512 = vsel %vm489, %v469, 0
      %v515 = vsel %vm489, %v470, 0
      %v518 = vsel %vm489, %v471, 0
      %v521 = vsel %vm489, %v472, 0
      %v524 = vsel %vm489, %v473, 0
      %v527 = vsel %vm489, %v474, 0
      %v530 = vsel %vm489, %v475, 0
      %v533 = vsel %vm489, %v476, 0
      %535 = vmatpush.bf16.msra.mxu0 0
      %536 = vmatpush.bf16.msra.mxu0 0
      %537 = vmatpush.bf16.msra.mxu0 0
      %538 = vmatpush.bf16.msra.mxu0 0
      %539 = vmatpush.bf16.msra.mxu0 0
      %540 = vmatpush.bf16.msra.mxu0 0
      %541 = vmatpush.bf16.msra.mxu0 %v486
      %542 = vmatpush.bf16.msra.mxu0 %v485
      %543 = vmatmul.bf16.gmra.mxu0 %v491
      %v544 = vpop.f32.mrf.mxu0
      %v545 = vadd.f32 %v400, %v544
      %v546 = vpop.f32.mrf.mxu0
      %v547 = vadd.f32 %v400, %v546
      %548 = vmatmul.bf16.gmra.mxu0 %v494
      %v549 = vpop.f32.mrf.mxu0
      %v550 = vadd.f32 %v400, %v549
      %v551 = vpop.f32.mrf.mxu0
      %v552 = vadd.f32 %v400, %v551
      %553 = vmatmul.bf16.gmra.mxu0 %v497
      %v554 = vpop.f32.mrf.mxu0
      %v555 = vadd.f32 %v400, %v554
      %v556 = vpop.f32.mrf.mxu0
      %v557 = vadd.f32 %v400, %v556
      %558 = vmatmul.bf16.gmra.mxu0 %v500
      %v559 = vpop.f32.mrf.mxu0
      %v560 = vadd.f32 %v400, %v559
      %v561 = vpop.f32.mrf.mxu0
      %v562 = vadd.f32 %v400, %v561
      %563 = vmatmul.bf16.gmra.mxu0 %v503
      %v564 = vpop.f32.mrf.mxu0
      %v565 = vadd.f32 %v400, %v564
      %v566 = vpop.f32.mrf.mxu0
      %v567 = vadd.f32 %v400, %v566
      %568 = vmatmul.bf16.gmra.mxu0 %v506
      %v569 = vpop.f32.mrf.mxu0
      %v570 = vadd.f32 %v400, %v569
      %v571 = vpop.f32.mrf.mxu0
      %v572 = vadd.f32 %v400, %v571
      %573 = vmatmul.bf16.gmra.mxu0 %v509
      %v574 = vpop.f32.mrf.mxu0
      %v575 = vadd.f32 %v400, %v574
      %v576 = vpop.f32.mrf.mxu0
      %v577 = vadd.f32 %v400, %v576
      %578 = vmatmul.bf16.gmra.mxu0 %v512
      %v579 = vpop.f32.mrf.mxu0
      %v580 = vadd.f32 %v400, %v579
      %v581 = vpop.f32.mrf.mxu0
      %v582 = vadd.f32 %v400, %v581
      %583 = vmatmul.bf16.gmra.mxu0 %v515
      %v584 = vpop.f32.mrf.mxu0
      %v585 = vadd.f32 %v400, %v584
      %v586 = vpop.f32.mrf.mxu0
      %v587 = vadd.f32 %v400, %v586
      %588 = vmatmul.bf16.gmra.mxu0 %v518
      %v589 = vpop.f32.mrf.mxu0
      %v590 = vadd.f32 %v400, %v589
      %v591 = vpop.f32.mrf.mxu0
      %v592 = vadd.f32 %v400, %v591
      %593 = vmatmul.bf16.gmra.mxu0 %v521
      %v594 = vpop.f32.mrf.mxu0
      %v595 = vadd.f32 %v400, %v594
      %v596 = vpop.f32.mrf.mxu0
      %v597 = vadd.f32 %v400, %v596
      %598 = vmatmul.bf16.gmra.mxu0 %v524
      %v599 = vpop.f32.mrf.mxu0
      %v600 = vadd.f32 %v400, %v599
      %v601 = vpop.f32.mrf.mxu0
      %v602 = vadd.f32 %v400, %v601
      %603 = vmatmul.bf16.gmra.mxu0 %v527
      %v604 = vpop.f32.mrf.mxu0
      %v605 = vadd.f32 %v400, %v604
      %v606 = vpop.f32.mrf.mxu0
      %v607 = vadd.f32 %v400, %v606
      %608 = vmatmul.bf16.gmra.mxu0 %v530
      %v609 = vpop.f32.mrf.mxu0
      %v610 = vadd.f32 %v400, %v609
      %v611 = vpop.f32.mrf.mxu0
      %v612 = vadd.f32 %v400, %v611
      %613 = vmatmul.bf16.gmra.mxu0 %v533
      %v614 = vpop.f32.mrf.mxu0
      %v615 = vadd.f32 %v400, %v614
      %v616 = vpop.f32.mrf.mxu0
      %v617 = vadd.f32 %v400, %v616
      %618 = vdwg.mxu0
      %vm619 = vcmask 130048
      %620 = vst.msk [vmem:[%s349] sm:$0xff] %vm619, %v545
      %621 = vst.msk [vmem:[%s349 + $0x8] sm:$0xff] %vm619, %v547
      %622 = vst.msk [vmem:[%s349 + $0x10] sm:$0xff] %vm619, %v550
      %623 = vst.msk [vmem:[%s349 + $0x18] sm:$0xff] %vm619, %v552
      %624 = vst.msk [vmem:[%s349 + $0x20] sm:$0xff] %vm619, %v555
      %625 = vst.msk [vmem:[%s349 + $0x28] sm:$0xff] %vm619, %v557
      %626 = vst.msk [vmem:[%s349 + $0x30] sm:$0xff] %vm619, %v560
      %627 = vst.msk [vmem:[%s349 + $0x38] sm:$0xff] %vm619, %v562
      %628 = vst.msk [vmem:[%s349 + $0x40] sm:$0xff] %vm619, %v565
      %629 = vst.msk [vmem:[%s349 + $0x48] sm:$0xff] %vm619, %v567
      %630 = vst.msk [vmem:[%s349 + $0x50] sm:$0xff] %vm619, %v570
      %631 = vst.msk [vmem:[%s349 + $0x58] sm:$0xff] %vm619, %v572
      %632 = vst.msk [vmem:[%s349 + $0x60] sm:$0xff] %vm619, %v575
      %633 = vst.msk [vmem:[%s349 + $0x68] sm:$0xff] %vm619, %v577
      %634 = vst.msk [vmem:[%s349 + $0x70] sm:$0xff] %vm619, %v580
      %635 = vst.msk [vmem:[%s349 + $0x78] sm:$0xff] %vm619, %v582
      %636 = vst.msk [vmem:[%s349 + $0x80] sm:$0xff] %vm619, %v585
      %637 = vst.msk [vmem:[%s349 + $0x88] sm:$0xff] %vm619, %v587
      %638 = vst.msk [vmem:[%s349 + $0x90] sm:$0xff] %vm619, %v590
      %639 = vst.msk [vmem:[%s349 + $0x98] sm:$0xff] %vm619, %v592
      %640 = vst.msk [vmem:[%s349 + $0xa0] sm:$0xff] %vm619, %v595
      %641 = vst.msk [vmem:[%s349 + $0xa8] sm:$0xff] %vm619, %v597
      %642 = vst.msk [vmem:[%s349 + $0xb0] sm:$0xff] %vm619, %v600
      %643 = vst.msk [vmem:[%s349 + $0xb8] sm:$0xff] %vm619, %v602
      %644 = vst.msk [vmem:[%s349 + $0xc0] sm:$0xff] %vm619, %v605
      %645 = vst.msk [vmem:[%s349 + $0xc8] sm:$0xff] %vm619, %v607
      %646 = vst.msk [vmem:[%s349 + $0xd0] sm:$0xff] %vm619, %v610
      %647 = vst.msk [vmem:[%s349 + $0xd8] sm:$0xff] %vm619, %v612
      %648 = vst.msk [vmem:[%s349 + $0xe0] sm:$0xff] %vm619, %v615
      %649 = vst.msk [vmem:[%s349 + $0xe8] sm:$0xff] %vm619, %v617
      %v650 = vld [vmem:[%s2] sm:$0xf]
      %v651 = vld [vmem:[%s2 + $0x4] sm:$0xf]
      %v652 = vld [vmem:[%s2 + $0x8] sm:$0xf]
      %v653 = vld [vmem:[%s2 + $0xc] sm:$0xf]
      %v654 = vld [vmem:[%s5] sm:$0x1]
      %v656 = vperm.slane %v654, 0
      %v662 = vunpack.c.l.b16 %v650
      %v663 = vunpack.c.l.b16 %v651
      %v664 = vunpack.c.l.b16 %v652
      %v665 = vunpack.c.l.b16 %v653
      %v666 = vpack.c.b16 %v663, %v662
      %v667 = vpack.c.b16 %v665, %v664
      %670 = vmatpush.bf16.msra.mxu0 0
      %671 = vmatpush.bf16.msra.mxu0 0
      %672 = vmatpush.bf16.msra.mxu0 0
      %673 = vmatpush.bf16.msra.mxu0 0
      %674 = vmatpush.bf16.msra.mxu0 0
      %675 = vmatpush.bf16.msra.mxu0 0
      %676 = vmatpush.bf16.msra.mxu0 %v667
      %677 = vmatpush.bf16.msra.mxu0 %v666
      %678 = vmatmul.bf16.gmra.mxu0 %v491
      %v679 = vpop.f32.mrf.mxu0
      %v680 = vadd.f32 %v656, %v679
      %v681 = vpop.f32.mrf.mxu0
      %v682 = vadd.f32 %v656, %v681
      %683 = vmatmul.bf16.gmra.mxu0 %v494
      %v684 = vpop.f32.mrf.mxu0
      %v685 = vadd.f32 %v656, %v684
      %v686 = vpop.f32.mrf.mxu0
      %v687 = vadd.f32 %v656, %v686
      %688 = vmatmul.bf16.gmra.mxu0 %v497
      %v689 = vpop.f32.mrf.mxu0
      %v690 = vadd.f32 %v656, %v689
      %v691 = vpop.f32.mrf.mxu0
      %v692 = vadd.f32 %v656, %v691
      %693 = vmatmul.bf16.gmra.mxu0 %v500
      %v694 = vpop.f32.mrf.mxu0
      %v695 = vadd.f32 %v656, %v694
      %v696 = vpop.f32.mrf.mxu0
      %v697 = vadd.f32 %v656, %v696
      %698 = vmatmul.bf16.gmra.mxu0 %v503
      %v699 = vpop.f32.mrf.mxu0
      %v700 = vadd.f32 %v656, %v699
      %v701 = vpop.f32.mrf.mxu0
      %v702 = vadd.f32 %v656, %v701
      %703 = vmatmul.bf16.gmra.mxu0 %v506
      %v704 = vpop.f32.mrf.mxu0
      %v705 = vadd.f32 %v656, %v704
      %v706 = vpop.f32.mrf.mxu0
      %v707 = vadd.f32 %v656, %v706
      %708 = vmatmul.bf16.gmra.mxu0 %v509
      %v709 = vpop.f32.mrf.mxu0
      %v710 = vadd.f32 %v656, %v709
      %v711 = vpop.f32.mrf.mxu0
      %v712 = vadd.f32 %v656, %v711
      %713 = vmatmul.bf16.gmra.mxu0 %v512
      %v714 = vpop.f32.mrf.mxu0
      %v715 = vadd.f32 %v656, %v714
      %v716 = vpop.f32.mrf.mxu0
      %v717 = vadd.f32 %v656, %v716
      %718 = vmatmul.bf16.gmra.mxu0 %v515
      %v719 = vpop.f32.mrf.mxu0
      %v720 = vadd.f32 %v656, %v719
      %v721 = vpop.f32.mrf.mxu0
      %v722 = vadd.f32 %v656, %v721
      %723 = vmatmul.bf16.gmra.mxu0 %v518
      %v724 = vpop.f32.mrf.mxu0
      %v725 = vadd.f32 %v656, %v724
      %v726 = vpop.f32.mrf.mxu0
      %v727 = vadd.f32 %v656, %v726
      %728 = vmatmul.bf16.gmra.mxu0 %v521
      %v729 = vpop.f32.mrf.mxu0
      %v730 = vadd.f32 %v656, %v729
      %v731 = vpop.f32.mrf.mxu0
      %v732 = vadd.f32 %v656, %v731
      %733 = vmatmul.bf16.gmra.mxu0 %v524
      %v734 = vpop.f32.mrf.mxu0
      %v735 = vadd.f32 %v656, %v734
      %v736 = vpop.f32.mrf.mxu0
      %v737 = vadd.f32 %v656, %v736
      %738 = vmatmul.bf16.gmra.mxu0 %v527
      %v739 = vpop.f32.mrf.mxu0
      %v740 = vadd.f32 %v656, %v739
      %v741 = vpop.f32.mrf.mxu0
      %v742 = vadd.f32 %v656, %v741
      %743 = vmatmul.bf16.gmra.mxu0 %v530
      %v744 = vpop.f32.mrf.mxu0
      %v745 = vadd.f32 %v656, %v744
      %v746 = vpop.f32.mrf.mxu0
      %v747 = vadd.f32 %v656, %v746
      %748 = vmatmul.bf16.gmra.mxu0 %v533
      %v749 = vpop.f32.mrf.mxu0
      %v750 = vadd.f32 %v656, %v749
      %v751 = vpop.f32.mrf.mxu0
      %v752 = vadd.f32 %v656, %v751
      %753 = vdwg.mxu0
      %754 = vst.msk [vmem:[%s355] sm:$0xff] %vm489, %v680
      %755 = vst.msk [vmem:[%s355 + $0x8] sm:$0xff] %vm489, %v682
      %756 = vst.msk [vmem:[%s355 + $0x10] sm:$0xff] %vm489, %v685
      %757 = vst.msk [vmem:[%s355 + $0x18] sm:$0xff] %vm489, %v687
      %758 = vst.msk [vmem:[%s355 + $0x20] sm:$0xff] %vm489, %v690
      %759 = vst.msk [vmem:[%s355 + $0x28] sm:$0xff] %vm489, %v692
      %760 = vst.msk [vmem:[%s355 + $0x30] sm:$0xff] %vm489, %v695
      %761 = vst.msk [vmem:[%s355 + $0x38] sm:$0xff] %vm489, %v697
      %762 = vst.msk [vmem:[%s355 + $0x40] sm:$0xff] %vm489, %v700
      %763 = vst.msk [vmem:[%s355 + $0x48] sm:$0xff] %vm489, %v702
      %764 = vst.msk [vmem:[%s355 + $0x50] sm:$0xff] %vm489, %v705
      %765 = vst.msk [vmem:[%s355 + $0x58] sm:$0xff] %vm489, %v707
      %766 = vst.msk [vmem:[%s355 + $0x60] sm:$0xff] %vm489, %v710
      %767 = vst.msk [vmem:[%s355 + $0x68] sm:$0xff] %vm489, %v712
      %768 = vst.msk [vmem:[%s355 + $0x70] sm:$0xff] %vm489, %v715
      %769 = vst.msk [vmem:[%s355 + $0x78] sm:$0xff] %vm489, %v717
      %770 = vst.msk [vmem:[%s355 + $0x80] sm:$0xff] %vm489, %v720
      %771 = vst.msk [vmem:[%s355 + $0x88] sm:$0xff] %vm489, %v722
      %772 = vst.msk [vmem:[%s355 + $0x90] sm:$0xff] %vm489, %v725
      %773 = vst.msk [vmem:[%s355 + $0x98] sm:$0xff] %vm489, %v727
      %774 = vst.msk [vmem:[%s355 + $0xa0] sm:$0xff] %vm489, %v730
      %775 = vst.msk [vmem:[%s355 + $0xa8] sm:$0xff] %vm489, %v732
      %776 = vst.msk [vmem:[%s355 + $0xb0] sm:$0xff] %vm489, %v735
      %777 = vst.msk [vmem:[%s355 + $0xb8] sm:$0xff] %vm489, %v737
      %778 = vst.msk [vmem:[%s355 + $0xc0] sm:$0xff] %vm489, %v740
      %779 = vst.msk [vmem:[%s355 + $0xc8] sm:$0xff] %vm489, %v742
      %780 = vst.msk [vmem:[%s355 + $0xd0] sm:$0xff] %vm489, %v745
      %781 = vst.msk [vmem:[%s355 + $0xd8] sm:$0xff] %vm489, %v747
      %782 = vst.msk [vmem:[%s355 + $0xe0] sm:$0xff] %vm489, %v750
      %783 = vst.msk [vmem:[%s355 + $0xe8] sm:$0xff] %vm489, %v752
      %v784 = vld [vmem:[%s3] sm:$0xf]
      %v785 = vld [vmem:[%s3 + $0x4] sm:$0xf]
      %v786 = vld [vmem:[%s3 + $0x8] sm:$0xf]
      %v787 = vld [vmem:[%s3 + $0xc] sm:$0xf]
      %v788 = vld [vmem:[%s6] sm:$0x1]
      %v790 = vperm.slane %v788, 0
      %v796 = vunpack.c.l.b16 %v784
      %v797 = vunpack.c.l.b16 %v785
      %v798 = vunpack.c.l.b16 %v786
      %v799 = vunpack.c.l.b16 %v787
      %v800 = vpack.c.b16 %v797, %v796
      %v801 = vpack.c.b16 %v799, %v798
      %804 = vmatpush.bf16.msra.mxu0 0
      %805 = vmatpush.bf16.msra.mxu0 0
      %806 = vmatpush.bf16.msra.mxu0 0
      %807 = vmatpush.bf16.msra.mxu0 0
      %808 = vmatpush.bf16.msra.mxu0 0
      %809 = vmatpush.bf16.msra.mxu0 0
      %810 = vmatpush.bf16.msra.mxu0 %v801
      %811 = vmatpush.bf16.msra.mxu0 %v800
      %812 = vmatmul.bf16.gmra.mxu0 %v491
      %v813 = vpop.f32.mrf.mxu0
      %v814 = vadd.f32 %v790, %v813
      %v815 = vpop.f32.mrf.mxu0
      %v816 = vadd.f32 %v790, %v815
      %817 = vmatmul.bf16.gmra.mxu0 %v494
      %v818 = vpop.f32.mrf.mxu0
      %v819 = vadd.f32 %v790, %v818
      %v820 = vpop.f32.mrf.mxu0
      %v821 = vadd.f32 %v790, %v820
      %822 = vmatmul.bf16.gmra.mxu0 %v497
      %v823 = vpop.f32.mrf.mxu0
      %v824 = vadd.f32 %v790, %v823
      %v825 = vpop.f32.mrf.mxu0
      %v826 = vadd.f32 %v790, %v825
      %827 = vmatmul.bf16.gmra.mxu0 %v500
      %v828 = vpop.f32.mrf.mxu0
      %v829 = vadd.f32 %v790, %v828
      %v830 = vpop.f32.mrf.mxu0
      %v831 = vadd.f32 %v790, %v830
      %832 = vmatmul.bf16.gmra.mxu0 %v503
      %v833 = vpop.f32.mrf.mxu0
      %v834 = vadd.f32 %v790, %v833
      %v835 = vpop.f32.mrf.mxu0
      %v836 = vadd.f32 %v790, %v835
      %837 = vmatmul.bf16.gmra.mxu0 %v506
      %v838 = vpop.f32.mrf.mxu0
      %v839 = vadd.f32 %v790, %v838
      %v840 = vpop.f32.mrf.mxu0
      %v841 = vadd.f32 %v790, %v840
      %842 = vmatmul.bf16.gmra.mxu0 %v509
      %v843 = vpop.f32.mrf.mxu0
      %v844 = vadd.f32 %v790, %v843
      %v845 = vpop.f32.mrf.mxu0
      %v846 = vadd.f32 %v790, %v845
      %847 = vmatmul.bf16.gmra.mxu0 %v512
      %v848 = vpop.f32.mrf.mxu0
      %v849 = vadd.f32 %v790, %v848
      %v850 = vpop.f32.mrf.mxu0
      %v851 = vadd.f32 %v790, %v850
      %852 = vmatmul.bf16.gmra.mxu0 %v515
      %v853 = vpop.f32.mrf.mxu0
      %v854 = vadd.f32 %v790, %v853
      %v855 = vpop.f32.mrf.mxu0
      %v856 = vadd.f32 %v790, %v855
      %857 = vmatmul.bf16.gmra.mxu0 %v518
      %v858 = vpop.f32.mrf.mxu0
      %v859 = vadd.f32 %v790, %v858
      %v860 = vpop.f32.mrf.mxu0
      %v861 = vadd.f32 %v790, %v860
      %862 = vmatmul.bf16.gmra.mxu0 %v521
      %v863 = vpop.f32.mrf.mxu0
      %v864 = vadd.f32 %v790, %v863
      %v865 = vpop.f32.mrf.mxu0
      %v866 = vadd.f32 %v790, %v865
      %867 = vmatmul.bf16.gmra.mxu0 %v524
      %v868 = vpop.f32.mrf.mxu0
      %v869 = vadd.f32 %v790, %v868
      %v870 = vpop.f32.mrf.mxu0
      %v871 = vadd.f32 %v790, %v870
      %872 = vmatmul.bf16.gmra.mxu0 %v527
      %v873 = vpop.f32.mrf.mxu0
      %v874 = vadd.f32 %v790, %v873
      %v875 = vpop.f32.mrf.mxu0
      %v876 = vadd.f32 %v790, %v875
      %877 = vmatmul.bf16.gmra.mxu0 %v530
      %v878 = vpop.f32.mrf.mxu0
      %v879 = vadd.f32 %v790, %v878
      %v880 = vpop.f32.mrf.mxu0
      %v881 = vadd.f32 %v790, %v880
      %882 = vmatmul.bf16.gmra.mxu0 %v533
      %v883 = vpop.f32.mrf.mxu0
      %v884 = vadd.f32 %v790, %v883
      %v885 = vpop.f32.mrf.mxu0
      %v886 = vadd.f32 %v790, %v885
      %887 = vdwg.mxu0
      %vm888 = vcmask 523264
      %889 = vst.msk [vmem:[%s361] sm:$0xff] %vm888, %v814
      %890 = vst.msk [vmem:[%s361 + $0x8] sm:$0xff] %vm888, %v816
      %891 = vst.msk [vmem:[%s361 + $0x10] sm:$0xff] %vm888, %v819
      %892 = vst.msk [vmem:[%s361 + $0x18] sm:$0xff] %vm888, %v821
      %893 = vst.msk [vmem:[%s361 + $0x20] sm:$0xff] %vm888, %v824
      %894 = vst.msk [vmem:[%s361 + $0x28] sm:$0xff] %vm888, %v826
      %895 = vst.msk [vmem:[%s361 + $0x30] sm:$0xff] %vm888, %v829
      %896 = vst.msk [vmem:[%s361 + $0x38] sm:$0xff] %vm888, %v831
      %897 = vst.msk [vmem:[%s361 + $0x40] sm:$0xff] %vm888, %v834
      %898 = vst.msk [vmem:[%s361 + $0x48] sm:$0xff] %vm888, %v836
      %899 = vst.msk [vmem:[%s361 + $0x50] sm:$0xff] %vm888, %v839
      %900 = vst.msk [vmem:[%s361 + $0x58] sm:$0xff] %vm888, %v841
      %901 = vst.msk [vmem:[%s361 + $0x60] sm:$0xff] %vm888, %v844
      %902 = vst.msk [vmem:[%s361 + $0x68] sm:$0xff] %vm888, %v846
      %903 = vst.msk [vmem:[%s361 + $0x70] sm:$0xff] %vm888, %v849
      %904 = vst.msk [vmem:[%s361 + $0x78] sm:$0xff] %vm888, %v851
      %905 = vst.msk [vmem:[%s361 + $0x80] sm:$0xff] %vm888, %v854
      %906 = vst.msk [vmem:[%s361 + $0x88] sm:$0xff] %vm888, %v856
      %907 = vst.msk [vmem:[%s361 + $0x90] sm:$0xff] %vm888, %v859
      %908 = vst.msk [vmem:[%s361 + $0x98] sm:$0xff] %vm888, %v861
      %909 = vst.msk [vmem:[%s361 + $0xa0] sm:$0xff] %vm888, %v864
      %910 = vst.msk [vmem:[%s361 + $0xa8] sm:$0xff] %vm888, %v866
      %911 = vst.msk [vmem:[%s361 + $0xb0] sm:$0xff] %vm888, %v869
      %912 = vst.msk [vmem:[%s361 + $0xb8] sm:$0xff] %vm888, %v871
      %913 = vst.msk [vmem:[%s361 + $0xc0] sm:$0xff] %vm888, %v874
      %914 = vst.msk [vmem:[%s361 + $0xc8] sm:$0xff] %vm888, %v876
      %915 = vst.msk [vmem:[%s361 + $0xd0] sm:$0xff] %vm888, %v879
      %916 = vst.msk [vmem:[%s361 + $0xd8] sm:$0xff] %vm888, %v881
      %917 = vst.msk [vmem:[%s361 + $0xe0] sm:$0xff] %vm888, %v884
      %918 = vst.msk [vmem:[%s361 + $0xe8] sm:$0xff] %vm888, %v886
      %s919 = smul.u32 30, %s21
      %p920 = scmp.lt.s32.totalorder %s919, 59
      %s921 = scalar_select %p920, %s919, 59
      %s922 = smul.addr %s921, 8
      %s923 = scalar_lea.vmem %s7, %s922
      %s924 = smul.u32 30, %s21
      %p925 = scmp.lt.s32.totalorder %s924, 59
      %s926 = scalar_select %p925, %s924, 59
      %s927 = smul.addr %s926, 8
      %s928 = scalar_lea.vmem %s8, %s927
      %s929 = smul.u32 30, %s21
      %p930 = scmp.lt.s32.totalorder %s929, 59
      %s931 = scalar_select %p930, %s929, 59
      %s932 = smul.addr %s931, 8
      %s933 = scalar_lea.vmem %s9, %s932
      // Predicated region
      $region49: #{tpu_custom_call.1} parent=47 // pred_check
        %p934 = pneg %p191
      $region50: #{tpu_custom_call.1} parent=47 // pred_check_branch
        %936 = sbr.rel (%p934) target = $region52
      $region51: #{tpu_custom_call.1} parent=47 // pred_region
        %s937 = smul.u32 30, %s21
      $region52: #{tpu_custom_call.1} parent=47 // pred_fallthru
        _
      // Predicated region
      $region53: #{tpu_custom_call.1} parent=47 // pred_check
        %p938 = pneg %p217
      $region54: #{tpu_custom_call.1} parent=47 // pred_check_branch
        %940 = sbr.rel (%p938) target = $region56
      $region55: #{tpu_custom_call.1} parent=47 // pred_region
        %s941 = smul.u32 30, %s21
      $region56: #{tpu_custom_call.1} parent=47 // pred_fallthru
        _
      // Predicated region
      $region57: #{tpu_custom_call.1} parent=47 // pred_check
        %p942 = pneg %p243
      $region58: #{tpu_custom_call.1} parent=47 // pred_check_branch
        %944 = sbr.rel (%p942) target = $region60
      $region59: #{tpu_custom_call.1} parent=47 // pred_region
        %s945 = smul.u32 30, %s21
      $region60: #{tpu_custom_call.1} parent=47 // pred_fallthru
        _
    $region48: #{tpu_custom_call.1} parent=5 // pred_fallthru
      _
    %p946 = scmp.le.s32.totalorder 2, %s16
    // Predicated region
    $region61: #{tpu_custom_call.1} parent=5 // pred_check
      %p947 = pneg %p946
    $region62: #{tpu_custom_call.1} parent=5 // pred_check_branch
      %949 = sbr.rel (%p947) target = $region64
    $region63: #{tpu_custom_call.1} parent=5 // pred_region
      %s950 = ssub.s32 %s16, 2
      // Predicated region
      $region65: #{tpu_custom_call.1} parent=63 // pred_check
        %p951 = pneg %p197
      $region66: #{tpu_custom_call.1} parent=63 // pred_check_branch
        %953 = sbr.rel (%p951) target = $region68
      $region67: #{tpu_custom_call.1} parent=63 // pred_region
        %s954 = smul.u32 30, %s22
        %p955 = scmp.lt.s32.totalorder %s954, 59
        %s956 = scalar_select %p955, %s954, 59
        %s957 = smul.addr %s956, 8
        %s958 = scalar_lea.vmem %s7, %s957
      $region68: #{tpu_custom_call.1} parent=63 // pred_fallthru
        _
      // Predicated region
      $region69: #{tpu_custom_call.1} parent=63 // pred_check
        %p959 = pneg %p223
      $region70: #{tpu_custom_call.1} parent=63 // pred_check_branch
        %961 = sbr.rel (%p959) target = $region72
      $region71: #{tpu_custom_call.1} parent=63 // pred_region
        %s962 = smul.u32 30, %s22
        %p963 = scmp.lt.s32.totalorder %s962, 59
        %s964 = scalar_select %p963, %s962, 59
        %s965 = smul.addr %s964, 8
        %s966 = scalar_lea.vmem %s8, %s965
      $region72: #{tpu_custom_call.1} parent=63 // pred_fallthru
        _
      // Predicated region
      $region73: #{tpu_custom_call.1} parent=63 // pred_check
        %p967 = pneg %p249
      $region74: #{tpu_custom_call.1} parent=63 // pred_check_branch
        %969 = sbr.rel (%p967) target = $region76
      $region75: #{tpu_custom_call.1} parent=63 // pred_region
        %s970 = smul.u32 30, %s22
        %p971 = scmp.lt.s32.totalorder %s970, 59
        %s972 = scalar_select %p971, %s970, 59
        %s973 = smul.addr %s972, 8
        %s974 = scalar_lea.vmem %s9, %s973
      $region76: #{tpu_custom_call.1} parent=63 // pred_fallthru
        _
    $region64: #{tpu_custom_call.1} parent=5 // pred_fallthru
      _
  $region6: #{tpu_custom_call.1} parent=0 // loop_footer
    %s20 = sadd.s32 1, %s16
  $region7: #{tpu_custom_call.1} parent=0 // loop_footer_branch
    %15 = sbr.rel target = $region3
  $region8: #{tpu_custom_call.1} parent=0 // loop_exit
    _

// kernel: tpu_custom_call.1
$region0: #{tpu_custom_call.1}
  #allocation0 [shape = 'u32[]', space=smem, size = 0x4, offset = 0x4, fixed_abs, tag = 'smem constant byte address 0x4 - core index']
  #allocation1 [shape = 'u32[72,128]{1,0:T(1,128)}', space=vmem, size = 0x9000, scoped, tag = 'internal scratch']
  %s0 = inlined_call_operand.vmem [shape: bf16[480,32], index: 0, kind: input, shape index: {}]
  %s1 = inlined_call_operand.vmem [shape: bf16[32,16], index: 1, kind: input, shape index: {}]
  %s2 = inlined_call_operand.vmem [shape: bf16[32,32], index: 2, kind: input, shape index: {}]
  %s3 = inlined_call_operand.vmem [shape: bf16[32,64], index: 3, kind: input, shape index: {}]
  %s4 = inlined_call_operand.vmem [shape: f32[1,16], index: 4, kind: input, shape index: {}]
  %s5 = inlined_call_operand.vmem [shape: f32[1,32], index: 5, kind: input, shape index: {}]
  %s6 = inlined_call_operand.vmem [shape: f32[1,64], index: 6, kind: input, shape index: {}]
  %s7 = inlined_call_operand.vmem [shape: f32[480,16], index: 7, kind: output, shape index: {0}]
  %s8 = inlined_call_operand.vmem [shape: f32[480,32], index: 8, kind: output, shape index: {1}]
  %s9 = inlined_call_operand.vmem [shape: f32[480,64], index: 9, kind: output, shape index: {2}]
  %10 = xla_tuple %s7, %s8, %s9
  %s11 = sld [smem:[#allocation0]]
  $region77: #{tpu_custom_call.1} parent=0
    _
  %s13 = ssub.s32 1, %s11
  %s14 = scalar_select 0, %s13, %s11
  loop: start=0, step=1, limit=4
  $region2: #{tpu_custom_call.1} parent=0 // loop_pre_header
    _
  $region3: #{tpu_custom_call.1} parent=0 // loop_header
    %s16 = sphi 0, %s20
    %p17 = scmp.ge.s32.totalorder %s16, 4
    %s26 = sphi 0, %s28
    %s29 = sphi 0, %s26
    %s30 = sphi 0, %s29
    %s46 = sphi 0, %s30
    %s50 = sphi 0, %s50
    %s52 = sphi 0, %s50
    %s53 = sphi 0, %s52
    %s67 = sphi 0, %s53
    %s71 = sphi 0, %s71
    %s73 = sphi 0, %s71
    %s74 = sphi 0, %s73
    %s88 = sphi 0, %s74
    %s92 = sphi 0, %s92
    %s94 = sphi 0, %s92
    %s95 = sphi 0, %s94
    %s109 = sphi 0, %s95
    %s113 = sphi 0, %s113
    %s115 = sphi 0, %s113
    %s116 = sphi 0, %s115
    %s130 = sphi 0, %s116
    %s134 = sphi 0, %s134
    %s136 = sphi 0, %s134
    %s137 = sphi 0, %s136
    %s151 = sphi 0, %s137
    %s155 = sphi 0, %s155
    %s157 = sphi 0, %s155
    %s158 = sphi 0, %s157
    %s172 = sphi 0, %s158
    %s178 = sphi 0, %s180
    %s181 = sphi 0, %s178
    %s182 = sphi 0, %s181
    %s198 = sphi 0, %s182
    %s204 = sphi 0, %s206
    %s207 = sphi 0, %s204
    %s208 = sphi 0, %s207
    %s224 = sphi 0, %s208
    %s230 = sphi 0, %s232
    %s233 = sphi 0, %s230
    %s234 = sphi 0, %s233
    %s250 = sphi 0, %s234
  $region4: #{tpu_custom_call.1} parent=0 // loop_header_branch
    %19 = sbr.rel (%p17) target = $region8
  $region5: #{tpu_custom_call.1} parent=0 // loop_body
    %s21 = ssub.s32 %s16, 1
    %s22 = ssub.s32 %s16, 2
    %s23 = sadd.s32 %s16, 1
    %s24 = ssub.s32 %s16, %s23
    %p25 = scmp.eq.s32.totalorder %s24, 0
    %s27 = sadd.s32 %s26, 1
    %s28 = scalar_select %p25, %s26, %s27
    %p31 = pneg %p25
    %p32 = scmp.eq.s32.totalorder %s16, 1
    %p33 = por %p31, %p32
    %p34 = scmp.ne.s32.totalorder %s26, %s29
    %p35 = scmp.eq.s32.totalorder %s16, 0
    %p36 = por %p34, %p35
    %p37 = scmp.ne.s32.totalorder %s26, %s29
    %p38 = scmp.eq.s32.totalorder %s21, 1
    %p39 = por %p37, %p38
    %p40 = scmp.ne.s32.totalorder %s29, %s30
    %p41 = scmp.eq.s32.totalorder %s21, 0
    %p42 = por %p40, %p41
    %p43 = scmp.ne.s32.totalorder %s29, %s30
    %p44 = scmp.eq.s32.totalorder %s22, 1
    %p45 = por %p43, %p44
    %p47 = scmp.ne.s32.totalorder %s30, %s46
    %p48 = scmp.eq.s32.totalorder %s22, 0
    %p49 = por %p47, %p48
    %s51 = sadd.s32 %s50, 1
    %p54 = scmp.eq.s32.totalorder %s16, 1
    %p55 = scmp.ne.s32.totalorder %s50, %s52
    %p56 = scmp.eq.s32.totalorder %s16, 0
    %p57 = por %p55, %p56
    %p58 = scmp.ne.s32.totalorder %s50, %s52
    %p59 = scmp.eq.s32.totalorder %s21, 1
    %p60 = por %p58, %p59
    %p61 = scmp.ne.s32.totalorder %s52, %s53
    %p62 = scmp.eq.s32.totalorder %s21, 0
    %p63 = por %p61, %p62
    %p64 = scmp.ne.s32.totalorder %s52, %s53
    %p65 = scmp.eq.s32.totalorder %s22, 1
    %p66 = por %p64, %p65
    %p68 = scmp.ne.s32.totalorder %s53, %s67
    %p69 = scmp.eq.s32.totalorder %s22, 0
    %p70 = por %p68, %p69
    %s72 = sadd.s32 %s71, 1
    %p75 = scmp.eq.s32.totalorder %s16, 1
    %p76 = scmp.ne.s32.totalorder %s71, %s73
    %p77 = scmp.eq.s32.totalorder %s16, 0
    %p78 = por %p76, %p77
    %p79 = scmp.ne.s32.totalorder %s71, %s73
    %p80 = scmp.eq.s32.totalorder %s21, 1
    %p81 = por %p79, %p80
    %p82 = scmp.ne.s32.totalorder %s73, %s74
    %p83 = scmp.eq.s32.totalorder %s21, 0
    %p84 = por %p82, %p83
    %p85 = scmp.ne.s32.totalorder %s73, %s74
    %p86 = scmp.eq.s32.totalorder %s22, 1
    %p87 = por %p85, %p86
    %p89 = scmp.ne.s32.totalorder %s74, %s88
    %p90 = scmp.eq.s32.totalorder %s22, 0
    %p91 = por %p89, %p90
    %s93 = sadd.s32 %s92, 1
    %p96 = scmp.eq.s32.totalorder %s16, 1
    %p97 = scmp.ne.s32.totalorder %s92, %s94
    %p98 = scmp.eq.s32.totalorder %s16, 0
    %p99 = por %p97, %p98
    %p100 = scmp.ne.s32.totalorder %s92, %s94
    %p101 = scmp.eq.s32.totalorder %s21, 1
    %p102 = por %p100, %p101
    %p103 = scmp.ne.s32.totalorder %s94, %s95
    %p104 = scmp.eq.s32.totalorder %s21, 0
    %p105 = por %p103, %p104
    %p106 = scmp.ne.s32.totalorder %s94, %s95
    %p107 = scmp.eq.s32.totalorder %s22, 1
    %p108 = por %p106, %p107
    %p110 = scmp.ne.s32.totalorder %s95, %s109
    %p111 = scmp.eq.s32.totalorder %s22, 0
    %p112 = por %p110, %p111
    %s114 = sadd.s32 %s113, 1
    %p117 = scmp.eq.s32.totalorder %s16, 1
    %p118 = scmp.ne.s32.totalorder %s113, %s115
    %p119 = scmp.eq.s32.totalorder %s16, 0
    %p120 = por %p118, %p119
    %p121 = scmp.ne.s32.totalorder %s113, %s115
    %p122 = scmp.eq.s32.totalorder %s21, 1
    %p123 = por %p121, %p122
    %p124 = scmp.ne.s32.totalorder %s115, %s116
    %p125 = scmp.eq.s32.totalorder %s21, 0
    %p126 = por %p124, %p125
    %p127 = scmp.ne.s32.totalorder %s115, %s116
    %p128 = scmp.eq.s32.totalorder %s22, 1
    %p129 = por %p127, %p128
    %p131 = scmp.ne.s32.totalorder %s116, %s130
    %p132 = scmp.eq.s32.totalorder %s22, 0
    %p133 = por %p131, %p132
    %s135 = sadd.s32 %s134, 1
    %p138 = scmp.eq.s32.totalorder %s16, 1
    %p139 = scmp.ne.s32.totalorder %s134, %s136
    %p140 = scmp.eq.s32.totalorder %s16, 0
    %p141 = por %p139, %p140
    %p142 = scmp.ne.s32.totalorder %s134, %s136
    %p143 = scmp.eq.s32.totalorder %s21, 1
    %p144 = por %p142, %p143
    %p145 = scmp.ne.s32.totalorder %s136, %s137
    %p146 = scmp.eq.s32.totalorder %s21, 0
    %p147 = por %p145, %p146
    %p148 = scmp.ne.s32.totalorder %s136, %s137
    %p149 = scmp.eq.s32.totalorder %s22, 1
    %p150 = por %p148, %p149
    %p152 = scmp.ne.s32.totalorder %s137, %s151
    %p153 = scmp.eq.s32.totalorder %s22, 0
    %p154 = por %p152, %p153
    %s156 = sadd.s32 %s155, 1
    %p159 = scmp.eq.s32.totalorder %s16, 1
    %p160 = scmp.ne.s32.totalorder %s155, %s157
    %p161 = scmp.eq.s32.totalorder %s16, 0
    %p162 = por %p160, %p161
    %p163 = scmp.ne.s32.totalorder %s155, %s157
    %p164 = scmp.eq.s32.totalorder %s21, 1
    %p165 = por %p163, %p164
    %p166 = scmp.ne.s32.totalorder %s157, %s158
    %p167 = scmp.eq.s32.totalorder %s21, 0
    %p168 = por %p166, %p167
    %p169 = scmp.ne.s32.totalorder %s157, %s158
    %p170 = scmp.eq.s32.totalorder %s22, 1
    %p171 = por %p169, %p170
    %p173 = scmp.ne.s32.totalorder %s158, %s172
    %p174 = scmp.eq.s32.totalorder %s22, 0
    %p175 = por %p173, %p174
    %s176 = ssub.s32 %s16, %s23
    %p177 = scmp.eq.s32.totalorder %s176, 0
    %s179 = sadd.s32 %s178, 1
    %s180 = scalar_select %p177, %s178, %s179
    %p183 = pneg %p177
    %p184 = scmp.eq.s32.totalorder %s16, 1
    %p185 = por %p183, %p184
    %p186 = scmp.ne.s32.totalorder %s178, %s181
    %p187 = scmp.eq.s32.totalorder %s16, 0
    %p188 = por %p186, %p187
    %p189 = scmp.ne.s32.totalorder %s178, %s181
    %p190 = scmp.eq.s32.totalorder %s21, 1
    %p191 = por %p189, %p190
    %p192 = scmp.ne.s32.totalorder %s181, %s182
    %p193 = scmp.eq.s32.totalorder %s21, 0
    %p194 = por %p192, %p193
    %p195 = scmp.ne.s32.totalorder %s181, %s182
    %p196 = scmp.eq.s32.totalorder %s22, 1
    %p197 = por %p195, %p196
    %p199 = scmp.ne.s32.totalorder %s182, %s198
    %p200 = scmp.eq.s32.totalorder %s22, 0
    %p201 = por %p199, %p200
    %s202 = ssub.s32 %s16, %s23
    %p203 = scmp.eq.s32.totalorder %s202, 0
    %s205 = sadd.s32 %s204, 1
    %s206 = scalar_select %p203, %s204, %s205
    %p209 = pneg %p203
    %p210 = scmp.eq.s32.totalorder %s16, 1
    %p211 = por %p209, %p210
    %p212 = scmp.ne.s32.totalorder %s204, %s207
    %p213 = scmp.eq.s32.totalorder %s16, 0
    %p214 = por %p212, %p213
    %p215 = scmp.ne.s32.totalorder %s204, %s207
    %p216 = scmp.eq.s32.totalorder %s21, 1
    %p217 = por %p215, %p216
    %p218 = scmp.ne.s32.totalorder %s207, %s208
    %p219 = scmp.eq.s32.totalorder %s21, 0
    %p220 = por %p218, %p219
    %p221 = scmp.ne.s32.totalorder %s207, %s208
    %p222 = scmp.eq.s32.totalorder %s22, 1
    %p223 = por %p221, %p222
    %p225 = scmp.ne.s32.totalorder %s208, %s224
    %p226 = scmp.eq.s32.totalorder %s22, 0
    %p227 = por %p225, %p226
    %s228 = ssub.s32 %s16, %s23
    %p229 = scmp.eq.s32.totalorder %s228, 0
    %s231 = sadd.s32 %s230, 1
    %s232 = scalar_select %p229, %s230, %s231
    %p235 = pneg %p229
    %p236 = scmp.eq.s32.totalorder %s16, 1
    %p237 = por %p235, %p236
    %p238 = scmp.ne.s32.totalorder %s230, %s233
    %p239 = scmp.eq.s32.totalorder %s16, 0
    %p240 = por %p238, %p239
    %p241 = scmp.ne.s32.totalorder %s230, %s233
    %p242 = scmp.eq.s32.totalorder %s21, 1
    %p243 = por %p241, %p242
    %p244 = scmp.ne.s32.totalorder %s233, %s234
    %p245 = scmp.eq.s32.totalorder %s21, 0
    %p246 = por %p244, %p245
    %p247 = scmp.ne.s32.totalorder %s233, %s234
    %p248 = scmp.eq.s32.totalorder %s22, 1
    %p249 = por %p247, %p248
    %p251 = scmp.ne.s32.totalorder %s234, %s250
    %p252 = scmp.eq.s32.totalorder %s22, 0
    %p253 = por %p251, %p252
    %p254 = scmp.le.s32.totalorder 1, %s16
    %p255 = scmp.lt.s32.totalorder %s16, 3
    %p256 = pnand %p254, %p255
    %p257 = pneg %p256
    // Predicated region
    $region9: #{tpu_custom_call.1} parent=5 // pred_check
      _
    $region10: #{tpu_custom_call.1} parent=5 // pred_check_branch
      %259 = sbr.rel (%p256) target = $region12
    $region11: #{tpu_custom_call.1} parent=5 // pred_region
      %s260 = ssub.s32 %s16, 1
      // Predicated region
      $region13: #{tpu_custom_call.1} parent=11 // pred_check
        %p261 = pneg %p63
      $region14: #{tpu_custom_call.1} parent=11 // pred_check_branch
        %263 = sbr.rel (%p261) target = $region16
      $region15: #{tpu_custom_call.1} parent=11 // pred_region
        _
      $region16: #{tpu_custom_call.1} parent=11 // pred_fallthru
        _
      // Predicated region
      $region17: #{tpu_custom_call.1} parent=11 // pred_check
        %p264 = pneg %p84
      $region18: #{tpu_custom_call.1} parent=11 // pred_check_branch
        %266 = sbr.rel (%p264) target = $region20
      $region19: #{tpu_custom_call.1} parent=11 // pred_region
        _
      $region20: #{tpu_custom_call.1} parent=11 // pred_fallthru
        _
      // Predicated region
      $region21: #{tpu_custom_call.1} parent=11 // pred_check
        %p267 = pneg %p105
      $region22: #{tpu_custom_call.1} parent=11 // pred_check_branch
        %269 = sbr.rel (%p267) target = $region24
      $region23: #{tpu_custom_call.1} parent=11 // pred_region
        _
      $region24: #{tpu_custom_call.1} parent=11 // pred_fallthru
        _
      // Predicated region
      $region25: #{tpu_custom_call.1} parent=11 // pred_check
        %p270 = pneg %p126
      $region26: #{tpu_custom_call.1} parent=11 // pred_check_branch
        %272 = sbr.rel (%p270) target = $region28
      $region27: #{tpu_custom_call.1} parent=11 // pred_region
        _
      $region28: #{tpu_custom_call.1} parent=11 // pred_fallthru
        _
      // Predicated region
      $region29: #{tpu_custom_call.1} parent=11 // pred_check
        %p273 = pneg %p147
      $region30: #{tpu_custom_call.1} parent=11 // pred_check_branch
        %275 = sbr.rel (%p273) target = $region32
      $region31: #{tpu_custom_call.1} parent=11 // pred_region
        _
      $region32: #{tpu_custom_call.1} parent=11 // pred_fallthru
        _
      // Predicated region
      $region33: #{tpu_custom_call.1} parent=11 // pred_check
        %p276 = pneg %p168
      $region34: #{tpu_custom_call.1} parent=11 // pred_check_branch
        %278 = sbr.rel (%p276) target = $region36
      $region35: #{tpu_custom_call.1} parent=11 // pred_region
        _
      $region36: #{tpu_custom_call.1} parent=11 // pred_fallthru
        _
    $region12: #{tpu_custom_call.1} parent=5 // pred_fallthru
      _
    %p279 = scmp.lt.s32.totalorder %s16, 2
    // Predicated region
    $region37: #{tpu_custom_call.1} parent=5 // pred_check
      %p280 = pneg %p279
    $region38: #{tpu_custom_call.1} parent=5 // pred_check_branch
      %282 = sbr.rel (%p280) target = $region40
    $region39: #{tpu_custom_call.1} parent=5 // pred_region
      // Predicated region
      $region41: #{tpu_custom_call.1} parent=39 // pred_check
        %p283 = pneg %p36
      $region42: #{tpu_custom_call.1} parent=39 // pred_check_branch
        %285 = sbr.rel (%p283) target = $region44
      $region43: #{tpu_custom_call.1} parent=39 // pred_region
        %s286 = smul.u32 30, %s16
        %p287 = scmp.lt.s32.totalorder %s286, 59
        %s288 = scalar_select %p287, %s286, 59
        %s289 = smul.addr %s288, 4
        %s290 = scalar_lea.vmem %s0, %s289
        %s291 = smul.u32 30, %s16
      $region44: #{tpu_custom_call.1} parent=39 // pred_fallthru
        _
    $region40: #{tpu_custom_call.1} parent=5 // pred_fallthru
      _
    %p292 = scmp.le.s32.totalorder 1, %s16
    %p293 = scmp.lt.s32.totalorder %s16, 3
    %p294 = pnand %p292, %p293
    %p295 = pneg %p294
    // Predicated region
    $region45: #{tpu_custom_call.1} parent=5 // pred_check
      _
    $region46: #{tpu_custom_call.1} parent=5 // pred_check_branch
      %297 = sbr.rel (%p294) target = $region48
    $region47: #{tpu_custom_call.1} parent=5 // pred_region
      %s298 = ssub.s32 %s16, 1
      %s299 = smul.u32 30, %s21
      %p300 = scmp.lt.s32.totalorder %s299, 59
      %s301 = scalar_select %p300, %s299, 59
      %s302 = smul.addr %s301, 4
      %s303 = scalar_lea.vmem %s0, %s302
      %p304 = pneg %p42
      %p305 = pneg %p39
      %p306 = pneg %p63
      %p307 = pneg %p60
      %p308 = pneg %p84
      %p309 = pneg %p81
      %p310 = pneg %p105
      %p311 = pneg %p102
      %p312 = pneg %p126
      %p313 = pneg %p123
      %p314 = pneg %p147
      %p315 = pneg %p144
      %p316 = pneg %p168
      %p317 = pneg %p165
      %p318 = pneg %p194
      %p319 = pneg %p191
      %s320 = smul.u32 30, %s21
      %p321 = scmp.lt.s32.totalorder %s320, 59
      %s322 = scalar_select %p321, %s320, 59
      %s323 = smul.addr %s322, 8
      %s324 = scalar_lea.vmem %s7, %s323
      %p325 = pneg %p220
      %p326 = pneg %p217
      %s327 = smul.u32 30, %s21
      %p328 = scmp.lt.s32.totalorder %s327, 59
      %s329 = scalar_select %p328, %s327, 59
      %s330 = smul.addr %s329, 8
      %s331 = scalar_lea.vmem %s8, %s330
      %p332 = pneg %p246
      %p333 = pneg %p243
      %s334 = smul.u32 30, %s21
      %p335 = scmp.lt.s32.totalorder %s334, 59
      %s336 = scalar_select %p335, %s334, 59
      %s337 = smul.addr %s336, 8
      %s338 = scalar_lea.vmem %s9, %s337
      %s339 = smul.u32 30, %s21
      %p340 = scmp.lt.s32.totalorder %s339, 59
      %s341 = scalar_select %p340, %s339, 59
      %s342 = smul.addr %s341, 4
      %s343 = scalar_lea.vmem %s0, %s342
      %s344 = smul.u32 30, %s21
      %s345 = smul.u32 30, %s21
      %p346 = scmp.lt.s32.totalorder %s345, 59
      %s347 = scalar_select %p346, %s345, 59
      %s348 = smul.addr %s347, 8
      %s349 = scalar_lea.vmem %s7, %s348
      %s350 = smul.u32 30, %s21
      %s351 = smul.u32 30, %s21
      %p352 = scmp.lt.s32.totalorder %s351, 59
      %s353 = scalar_select %p352, %s351, 59
      %s354 = smul.addr %s353, 8
      %s355 = scalar_lea.vmem %s8, %s354
      %s356 = smul.u32 30, %s21
      %s357 = smul.u32 30, %s21
      %p358 = scmp.lt.s32.totalorder %s357, 59
      %s359 = scalar_select %p358, %s357, 59
      %s360 = smul.addr %s359, 8
      %s361 = scalar_lea.vmem %s9, %s360
      %s362 = smul.u32 30, %s21
      %v364 = vld [vmem:[%s343] sm:$0xf]
      %v365 = vld [vmem:[%s343 + $0x4] sm:$0xf]
      %v366 = vld [vmem:[%s343 + $0x8] sm:$0xf]
      %v367 = vld [vmem:[%s343 + $0xc] sm:$0xf]
      %v368 = vld [vmem:[%s343 + $0x10] sm:$0xf]
      %v369 = vld [vmem:[%s343 + $0x14] sm:$0xf]
      %v370 = vld [vmem:[%s343 + $0x18] sm:$0xf]
      %v371 = vld [vmem:[%s343 + $0x1c] sm:$0xf]
      %v372 = vld [vmem:[%s343 + $0x20] sm:$0xf]
      %v373 = vld [vmem:[%s343 + $0x24] sm:$0xf]
      %v374 = vld [vmem:[%s343 + $0x28] sm:$0xf]
      %v375 = vld [vmem:[%s343 + $0x2c] sm:$0xf]
      %v376 = vld [vmem:[%s343 + $0x30] sm:$0xf]
      %v377 = vld [vmem:[%s343 + $0x34] sm:$0xf]
      %v378 = vld [vmem:[%s343 + $0x38] sm:$0xf]
      %v379 = vld [vmem:[%s343 + $0x3c] sm:$0xf]
      %v380 = vld [vmem:[%s343 + $0x40] sm:$0xf]
      %v381 = vld [vmem:[%s343 + $0x44] sm:$0xf]
      %v382 = vld [vmem:[%s343 + $0x48] sm:$0xf]
      %v383 = vld [vmem:[%s343 + $0x4c] sm:$0xf]
      %v384 = vld [vmem:[%s343 + $0x50] sm:$0xf]
      %v385 = vld [vmem:[%s343 + $0x54] sm:$0xf]
      %v386 = vld [vmem:[%s343 + $0x58] sm:$0xf]
      %v387 = vld [vmem:[%s343 + $0x5c] sm:$0xf]
      %v388 = vld [vmem:[%s343 + $0x60] sm:$0xf]
      %v389 = vld [vmem:[%s343 + $0x64] sm:$0xf]
      %v390 = vld [vmem:[%s343 + $0x68] sm:$0xf]
      %v391 = vld [vmem:[%s343 + $0x6c] sm:$0xf]
      %v392 = vld [vmem:[%s343 + $0x70] sm:$0xf]
      %v393 = vld [vmem:[%s343 + $0x74] sm:$0xf]
      %v394 = vld [vmem:[%s1] sm:$0xf]
      %v395 = vld [vmem:[%s1 + $0x4] sm:$0xf]
      %v396 = vld [vmem:[%s1 + $0x8] sm:$0xf]
      %v397 = vld [vmem:[%s1 + $0xc] sm:$0xf]
      %v398 = vld [vmem:[%s4] sm:$0x1]
      %v400 = vperm.slane %v398, 0
      %v432 = vunpack.c.l.b16 %v364
      %v433 = vunpack.c.l.b16 %v365
      %v434 = vunpack.c.l.b16 %v366
      %v435 = vunpack.c.l.b16 %v367
      %v436 = vunpack.c.l.b16 %v368
      %v437 = vunpack.c.l.b16 %v369
      %v438 = vunpack.c.l.b16 %v370
      %v439 = vunpack.c.l.b16 %v371
      %v440 = vunpack.c.l.b16 %v372
      %v441 = vunpack.c.l.b16 %v373
      %v442 = vunpack.c.l.b16 %v374
      %v443 = vunpack.c.l.b16 %v375
      %v444 = vunpack.c.l.b16 %v376
      %v445 = vunpack.c.l.b16 %v377
      %v446 = vunpack.c.l.b16 %v378
      %v447 = vunpack.c.l.b16 %v379
      %v448 = vunpack.c.l.b16 %v380
      %v449 = vunpack.c.l.b16 %v381
      %v450 = vunpack.c.l.b16 %v382
      %v451 = vunpack.c.l.b16 %v383
      %v452 = vunpack.c.l.b16 %v384
      %v453 = vunpack.c.l.b16 %v385
      %v454 = vunpack.c.l.b16 %v386
      %v455 = vunpack.c.l.b16 %v387
      %v456 = vunpack.c.l.b16 %v388
      %v457 = vunpack.c.l.b16 %v389
      %v458 = vunpack.c.l.b16 %v390
      %v459 = vunpack.c.l.b16 %v391
      %v460 = vunpack.c.l.b16 %v392
      %v461 = vunpack.c.l.b16 %v393
      %v462 = vpack.c.b16 %v433, %v432
      %v463 = vpack.c.b16 %v435, %v434
      %v464 = vpack.c.b16 %v437, %v436
      %v465 = vpack.c.b16 %v439, %v438
      %v466 = vpack.c.b16 %v441, %v440
      %v467 = vpack.c.b16 %v443, %v442
      %v468 = vpack.c.b16 %v445, %v444
      %v469 = vpack.c.b16 %v447, %v446
      %v470 = vpack.c.b16 %v449, %v448
      %v471 = vpack.c.b16 %v451, %v450
      %v472 = vpack.c.b16 %v453, %v452
      %v473 = vpack.c.b16 %v455, %v454
      %v474 = vpack.c.b16 %v457, %v456
      %v475 = vpack.c.b16 %v459, %v458
      %v476 = vpack.c.b16 %v461, %v460
      %v481 = vunpack.c.l.b16 %v394
      %v482 = vunpack.c.l.b16 %v395
      %v483 = vunpack.c.l.b16 %v396
      %v484 = vunpack.c.l.b16 %v397
      %v485 = vpack.c.b16 %v482, %v481
      %v486 = vpack.c.b16 %v484, %v483
      %vm489 = vcmask 261120
      %v491 = vsel %vm489, %v462, 0
      %v494 = vsel %vm489, %v463, 0
      %v497 = vsel %vm489, %v464, 0
      %v500 = vsel %vm489, %v465, 0
      %v503 = vsel %vm489, %v466, 0
      %v506 = vsel %vm489, %v467, 0
      %v509 = vsel %vm489, %v468, 0
      %v512 = vsel %vm489, %v469, 0
      %v515 = vsel %vm489, %v470, 0
      %v518 = vsel %vm489, %v471, 0
      %v521 = vsel %vm489, %v472, 0
      %v524 = vsel %vm489, %v473, 0
      %v527 = vsel %vm489, %v474, 0
      %v530 = vsel %vm489, %v475, 0
      %v533 = vsel %vm489, %v476, 0
      %535 = vmatpush.bf16.msra.mxu0 0
      %536 = vmatpush.bf16.msra.mxu0 0
      %537 = vmatpush.bf16.msra.mxu0 0
      %538 = vmatpush.bf16.msra.mxu0 0
      %539 = vmatpush.bf16.msra.mxu0 0
      %540 = vmatpush.bf16.msra.mxu0 0
      %541 = vmatpush.bf16.msra.mxu0 %v486
      %542 = vmatpush.bf16.msra.mxu0 %v485
      %543 = vmatmul.bf16.gmra.mxu0 %v491
      %v544 = vpop.f32.mrf.mxu0
      %v545 = vadd.f32 %v400, %v544
      %v546 = vpop.f32.mrf.mxu0
      %v547 = vadd.f32 %v400, %v546
      %548 = vmatmul.bf16.gmra.mxu0 %v494
      %v549 = vpop.f32.mrf.mxu0
      %v550 = vadd.f32 %v400, %v549
      %v551 = vpop.f32.mrf.mxu0
      %v552 = vadd.f32 %v400, %v551
      %553 = vmatmul.bf16.gmra.mxu0 %v497
      %v554 = vpop.f32.mrf.mxu0
      %v555 = vadd.f32 %v400, %v554
      %v556 = vpop.f32.mrf.mxu0
      %v557 = vadd.f32 %v400, %v556
      %558 = vmatmul.bf16.gmra.mxu0 %v500
      %v559 = vpop.f32.mrf.mxu0
      %v560 = vadd.f32 %v400, %v559
      %v561 = vpop.f32.mrf.mxu0
      %v562 = vadd.f32 %v400, %v561
      %563 = vmatmul.bf16.gmra.mxu0 %v503
      %v564 = vpop.f32.mrf.mxu0
      %v565 = vadd.f32 %v400, %v564
      %v566 = vpop.f32.mrf.mxu0
      %v567 = vadd.f32 %v400, %v566
      %568 = vmatmul.bf16.gmra.mxu0 %v506
      %v569 = vpop.f32.mrf.mxu0
      %v570 = vadd.f32 %v400, %v569
      %v571 = vpop.f32.mrf.mxu0
      %v572 = vadd.f32 %v400, %v571
      %573 = vmatmul.bf16.gmra.mxu0 %v509
      %v574 = vpop.f32.mrf.mxu0
      %v575 = vadd.f32 %v400, %v574
      %v576 = vpop.f32.mrf.mxu0
      %v577 = vadd.f32 %v400, %v576
      %578 = vmatmul.bf16.gmra.mxu0 %v512
      %v579 = vpop.f32.mrf.mxu0
      %v580 = vadd.f32 %v400, %v579
      %v581 = vpop.f32.mrf.mxu0
      %v582 = vadd.f32 %v400, %v581
      %583 = vmatmul.bf16.gmra.mxu0 %v515
      %v584 = vpop.f32.mrf.mxu0
      %v585 = vadd.f32 %v400, %v584
      %v586 = vpop.f32.mrf.mxu0
      %v587 = vadd.f32 %v400, %v586
      %588 = vmatmul.bf16.gmra.mxu0 %v518
      %v589 = vpop.f32.mrf.mxu0
      %v590 = vadd.f32 %v400, %v589
      %v591 = vpop.f32.mrf.mxu0
      %v592 = vadd.f32 %v400, %v591
      %593 = vmatmul.bf16.gmra.mxu0 %v521
      %v594 = vpop.f32.mrf.mxu0
      %v595 = vadd.f32 %v400, %v594
      %v596 = vpop.f32.mrf.mxu0
      %v597 = vadd.f32 %v400, %v596
      %598 = vmatmul.bf16.gmra.mxu0 %v524
      %v599 = vpop.f32.mrf.mxu0
      %v600 = vadd.f32 %v400, %v599
      %v601 = vpop.f32.mrf.mxu0
      %v602 = vadd.f32 %v400, %v601
      %603 = vmatmul.bf16.gmra.mxu0 %v527
      %v604 = vpop.f32.mrf.mxu0
      %v605 = vadd.f32 %v400, %v604
      %v606 = vpop.f32.mrf.mxu0
      %v607 = vadd.f32 %v400, %v606
      %608 = vmatmul.bf16.gmra.mxu0 %v530
      %v609 = vpop.f32.mrf.mxu0
      %v610 = vadd.f32 %v400, %v609
      %v611 = vpop.f32.mrf.mxu0
      %v612 = vadd.f32 %v400, %v611
      %613 = vmatmul.bf16.gmra.mxu0 %v533
      %v614 = vpop.f32.mrf.mxu0
      %v615 = vadd.f32 %v400, %v614
      %v616 = vpop.f32.mrf.mxu0
      %v617 = vadd.f32 %v400, %v616
      %618 = vdwg.mxu0
      %vm619 = vcmask 130048
      %620 = vst.msk [vmem:[%s349] sm:$0xff] %vm619, %v545
      %621 = vst.msk [vmem:[%s349 + $0x8] sm:$0xff] %vm619, %v547
      %622 = vst.msk [vmem:[%s349 + $0x10] sm:$0xff] %vm619, %v550
      %623 = vst.msk [vmem:[%s349 + $0x18] sm:$0xff] %vm619, %v552
      %624 = vst.msk [vmem:[%s349 + $0x20] sm:$0xff] %vm619, %v555
      %625 = vst.msk [vmem:[%s349 + $0x28] sm:$0xff] %vm619, %v557
      %626 = vst.msk [vmem:[%s349 + $0x30] sm:$0xff] %vm619, %v560
      %627 = vst.msk [vmem:[%s349 + $0x38] sm:$0xff] %vm619, %v562
      %628 = vst.msk [vmem:[%s349 + $0x40] sm:$0xff] %vm619, %v565
      %629 = vst.msk [vmem:[%s349 + $0x48] sm:$0xff] %vm619, %v567
      %630 = vst.msk [vmem:[%s349 + $0x50] sm:$0xff] %vm619, %v570
      %631 = vst.msk [vmem:[%s349 + $0x58] sm:$0xff] %vm619, %v572
      %632 = vst.msk [vmem:[%s349 + $0x60] sm:$0xff] %vm619, %v575
      %633 = vst.msk [vmem:[%s349 + $0x68] sm:$0xff] %vm619, %v577
      %634 = vst.msk [vmem:[%s349 + $0x70] sm:$0xff] %vm619, %v580
      %635 = vst.msk [vmem:[%s349 + $0x78] sm:$0xff] %vm619, %v582
      %636 = vst.msk [vmem:[%s349 + $0x80] sm:$0xff] %vm619, %v585
      %637 = vst.msk [vmem:[%s349 + $0x88] sm:$0xff] %vm619, %v587
      %638 = vst.msk [vmem:[%s349 + $0x90] sm:$0xff] %vm619, %v590
      %639 = vst.msk [vmem:[%s349 + $0x98] sm:$0xff] %vm619, %v592
      %640 = vst.msk [vmem:[%s349 + $0xa0] sm:$0xff] %vm619, %v595
      %641 = vst.msk [vmem:[%s349 + $0xa8] sm:$0xff] %vm619, %v597
      %642 = vst.msk [vmem:[%s349 + $0xb0] sm:$0xff] %vm619, %v600
      %643 = vst.msk [vmem:[%s349 + $0xb8] sm:$0xff] %vm619, %v602
      %644 = vst.msk [vmem:[%s349 + $0xc0] sm:$0xff] %vm619, %v605
      %645 = vst.msk [vmem:[%s349 + $0xc8] sm:$0xff] %vm619, %v607
      %646 = vst.msk [vmem:[%s349 + $0xd0] sm:$0xff] %vm619, %v610
      %647 = vst.msk [vmem:[%s349 + $0xd8] sm:$0xff] %vm619, %v612
      %648 = vst.msk [vmem:[%s349 + $0xe0] sm:$0xff] %vm619, %v615
      %649 = vst.msk [vmem:[%s349 + $0xe8] sm:$0xff] %vm619, %v617
      %v650 = vld [vmem:[%s2] sm:$0xf]
      %v651 = vld [vmem:[%s2 + $0x4] sm:$0xf]
      %v652 = vld [vmem:[%s2 + $0x8] sm:$0xf]
      %v653 = vld [vmem:[%s2 + $0xc] sm:$0xf]
      %v654 = vld [vmem:[%s5] sm:$0x1]
      %v656 = vperm.slane %v654, 0
      %v662 = vunpack.c.l.b16 %v650
      %v663 = vunpack.c.l.b16 %v651
      %v664 = vunpack.c.l.b16 %v652
      %v665 = vunpack.c.l.b16 %v653
      %v666 = vpack.c.b16 %v663, %v662
      %v667 = vpack.c.b16 %v665, %v664
      %670 = vmatpush.bf16.msra.mxu0 0
      %671 = vmatpush.bf16.msra.mxu0 0
      %672 = vmatpush.bf16.msra.mxu0 0
      %673 = vmatpush.bf16.msra.mxu0 0
      %674 = vmatpush.bf16.msra.mxu0 0
      %675 = vmatpush.bf16.msra.mxu0 0
      %676 = vmatpush.bf16.msra.mxu0 %v667
      %677 = vmatpush.bf16.msra.mxu0 %v666
      %678 = vmatmul.bf16.gmra.mxu0 %v491
      %v679 = vpop.f32.mrf.mxu0
      %v680 = vadd.f32 %v656, %v679
      %v681 = vpop.f32.mrf.mxu0
      %v682 = vadd.f32 %v656, %v681
      %683 = vmatmul.bf16.gmra.mxu0 %v494
      %v684 = vpop.f32.mrf.mxu0
      %v685 = vadd.f32 %v656, %v684
      %v686 = vpop.f32.mrf.mxu0
      %v687 = vadd.f32 %v656, %v686
      %688 = vmatmul.bf16.gmra.mxu0 %v497
      %v689 = vpop.f32.mrf.mxu0
      %v690 = vadd.f32 %v656, %v689
      %v691 = vpop.f32.mrf.mxu0
      %v692 = vadd.f32 %v656, %v691
      %693 = vmatmul.bf16.gmra.mxu0 %v500
      %v694 = vpop.f32.mrf.mxu0
      %v695 = vadd.f32 %v656, %v694
      %v696 = vpop.f32.mrf.mxu0
      %v697 = vadd.f32 %v656, %v696
      %698 = vmatmul.bf16.gmra.mxu0 %v503
      %v699 = vpop.f32.mrf.mxu0
      %v700 = vadd.f32 %v656, %v699
      %v701 = vpop.f32.mrf.mxu0
      %v702 = vadd.f32 %v656, %v701
      %703 = vmatmul.bf16.gmra.mxu0 %v506
      %v704 = vpop.f32.mrf.mxu0
      %v705 = vadd.f32 %v656, %v704
      %v706 = vpop.f32.mrf.mxu0
      %v707 = vadd.f32 %v656, %v706
      %708 = vmatmul.bf16.gmra.mxu0 %v509
      %v709 = vpop.f32.mrf.mxu0
      %v710 = vadd.f32 %v656, %v709
      %v711 = vpop.f32.mrf.mxu0
      %v712 = vadd.f32 %v656, %v711
      %713 = vmatmul.bf16.gmra.mxu0 %v512
      %v714 = vpop.f32.mrf.mxu0
      %v715 = vadd.f32 %v656, %v714
      %v716 = vpop.f32.mrf.mxu0
      %v717 = vadd.f32 %v656, %v716
      %718 = vmatmul.bf16.gmra.mxu0 %v515
      %v719 = vpop.f32.mrf.mxu0
      %v720 = vadd.f32 %v656, %v719
      %v721 = vpop.f32.mrf.mxu0
      %v722 = vadd.f32 %v656, %v721
      %723 = vmatmul.bf16.gmra.mxu0 %v518
      %v724 = vpop.f32.mrf.mxu0
      %v725 = vadd.f32 %v656, %v724
      %v726 = vpop.f32.mrf.mxu0
      %v727 = vadd.f32 %v656, %v726
      %728 = vmatmul.bf16.gmra.mxu0 %v521
      %v729 = vpop.f32.mrf.mxu0
      %v730 = vadd.f32 %v656, %v729
      %v731 = vpop.f32.mrf.mxu0
      %v732 = vadd.f32 %v656, %v731
      %733 = vmatmul.bf16.gmra.mxu0 %v524
      %v734 = vpop.f32.mrf.mxu0
      %v735 = vadd.f32 %v656, %v734
      %v736 = vpop.f32.mrf.mxu0
      %v737 = vadd.f32 %v656, %v736
      %738 = vmatmul.bf16.gmra.mxu0 %v527
      %v739 = vpop.f32.mrf.mxu0
      %v740 = vadd.f32 %v656, %v739
      %v741 = vpop.f32.mrf.mxu0
      %v742 = vadd.f32 %v656, %v741
      %743 = vmatmul.bf16.gmra.mxu0 %v530
      %v744 = vpop.f32.mrf.mxu0
      %v745 = vadd.f32 %v656, %v744
      %v746 = vpop.f32.mrf.mxu0
      %v747 = vadd.f32 %v656, %v746
      %748 = vmatmul.bf16.gmra.mxu0 %v533
      %v749 = vpop.f32.mrf.mxu0
      %v750 = vadd.f32 %v656, %v749
      %v751 = vpop.f32.mrf.mxu0
      %v752 = vadd.f32 %v656, %v751
      %753 = vdwg.mxu0
      %754 = vst.msk [vmem:[%s355] sm:$0xff] %vm489, %v680
      %755 = vst.msk [vmem:[%s355 + $0x8] sm:$0xff] %vm489, %v682
      %756 = vst.msk [vmem:[%s355 + $0x10] sm:$0xff] %vm489, %v685
      %757 = vst.msk [vmem:[%s355 + $0x18] sm:$0xff] %vm489, %v687
      %758 = vst.msk [vmem:[%s355 + $0x20] sm:$0xff] %vm489, %v690
      %759 = vst.msk [vmem:[%s355 + $0x28] sm:$0xff] %vm489, %v692
      %760 = vst.msk [vmem:[%s355 + $0x30] sm:$0xff] %vm489, %v695
      %761 = vst.msk [vmem:[%s355 + $0x38] sm:$0xff] %vm489, %v697
      %762 = vst.msk [vmem:[%s355 + $0x40] sm:$0xff] %vm489, %v700
      %763 = vst.msk [vmem:[%s355 + $0x48] sm:$0xff] %vm489, %v702
      %764 = vst.msk [vmem:[%s355 + $0x50] sm:$0xff] %vm489, %v705
      %765 = vst.msk [vmem:[%s355 + $0x58] sm:$0xff] %vm489, %v707
      %766 = vst.msk [vmem:[%s355 + $0x60] sm:$0xff] %vm489, %v710
      %767 = vst.msk [vmem:[%s355 + $0x68] sm:$0xff] %vm489, %v712
      %768 = vst.msk [vmem:[%s355 + $0x70] sm:$0xff] %vm489, %v715
      %769 = vst.msk [vmem:[%s355 + $0x78] sm:$0xff] %vm489, %v717
      %770 = vst.msk [vmem:[%s355 + $0x80] sm:$0xff] %vm489, %v720
      %771 = vst.msk [vmem:[%s355 + $0x88] sm:$0xff] %vm489, %v722
      %772 = vst.msk [vmem:[%s355 + $0x90] sm:$0xff] %vm489, %v725
      %773 = vst.msk [vmem:[%s355 + $0x98] sm:$0xff] %vm489, %v727
      %774 = vst.msk [vmem:[%s355 + $0xa0] sm:$0xff] %vm489, %v730
      %775 = vst.msk [vmem:[%s355 + $0xa8] sm:$0xff] %vm489, %v732
      %776 = vst.msk [vmem:[%s355 + $0xb0] sm:$0xff] %vm489, %v735
      %777 = vst.msk [vmem:[%s355 + $0xb8] sm:$0xff] %vm489, %v737
      %778 = vst.msk [vmem:[%s355 + $0xc0] sm:$0xff] %vm489, %v740
      %779 = vst.msk [vmem:[%s355 + $0xc8] sm:$0xff] %vm489, %v742
      %780 = vst.msk [vmem:[%s355 + $0xd0] sm:$0xff] %vm489, %v745
      %781 = vst.msk [vmem:[%s355 + $0xd8] sm:$0xff] %vm489, %v747
      %782 = vst.msk [vmem:[%s355 + $0xe0] sm:$0xff] %vm489, %v750
      %783 = vst.msk [vmem:[%s355 + $0xe8] sm:$0xff] %vm489, %v752
      %v784 = vld [vmem:[%s3] sm:$0xf]
      %v785 = vld [vmem:[%s3 + $0x4] sm:$0xf]
      %v786 = vld [vmem:[%s3 + $0x8] sm:$0xf]
      %v787 = vld [vmem:[%s3 + $0xc] sm:$0xf]
      %v788 = vld [vmem:[%s6] sm:$0x1]
      %v790 = vperm.slane %v788, 0
      %v796 = vunpack.c.l.b16 %v784
      %v797 = vunpack.c.l.b16 %v785
      %v798 = vunpack.c.l.b16 %v786
      %v799 = vunpack.c.l.b16 %v787
      %v800 = vpack.c.b16 %v797, %v796
      %v801 = vpack.c.b16 %v799, %v798
      %804 = vmatpush.bf16.msra.mxu0 0
      %805 = vmatpush.bf16.msra.mxu0 0
      %806 = vmatpush.bf16.msra.mxu0 0
      %807 = vmatpush.bf16.msra.mxu0 0
      %808 = vmatpush.bf16.msra.mxu0 0
      %809 = vmatpush.bf16.msra.mxu0 0
      %810 = vmatpush.bf16.msra.mxu0 %v801
      %811 = vmatpush.bf16.msra.mxu0 %v800
      %812 = vmatmul.bf16.gmra.mxu0 %v491
      %v813 = vpop.f32.mrf.mxu0
      %v814 = vadd.f32 %v790, %v813
      %v815 = vpop.f32.mrf.mxu0
      %v816 = vadd.f32 %v790, %v815
      %817 = vmatmul.bf16.gmra.mxu0 %v494
      %v818 = vpop.f32.mrf.mxu0
      %v819 = vadd.f32 %v790, %v818
      %v820 = vpop.f32.mrf.mxu0
      %v821 = vadd.f32 %v790, %v820
      %822 = vmatmul.bf16.gmra.mxu0 %v497
      %v823 = vpop.f32.mrf.mxu0
      %v824 = vadd.f32 %v790, %v823
      %v825 = vpop.f32.mrf.mxu0
      %v826 = vadd.f32 %v790, %v825
      %827 = vmatmul.bf16.gmra.mxu0 %v500
      %v828 = vpop.f32.mrf.mxu0
      %v829 = vadd.f32 %v790, %v828
      %v830 = vpop.f32.mrf.mxu0
      %v831 = vadd.f32 %v790, %v830
      %832 = vmatmul.bf16.gmra.mxu0 %v503
      %v833 = vpop.f32.mrf.mxu0
      %v834 = vadd.f32 %v790, %v833
      %v835 = vpop.f32.mrf.mxu0
      %v836 = vadd.f32 %v790, %v835
      %837 = vmatmul.bf16.gmra.mxu0 %v506
      %v838 = vpop.f32.mrf.mxu0
      %v839 = vadd.f32 %v790, %v838
      %v840 = vpop.f32.mrf.mxu0
      %v841 = vadd.f32 %v790, %v840
      %842 = vmatmul.bf16.gmra.mxu0 %v509
      %v843 = vpop.f32.mrf.mxu0
      %v844 = vadd.f32 %v790, %v843
      %v845 = vpop.f32.mrf.mxu0
      %v846 = vadd.f32 %v790, %v845
      %847 = vmatmul.bf16.gmra.mxu0 %v512
      %v848 = vpop.f32.mrf.mxu0
      %v849 = vadd.f32 %v790, %v848
      %v850 = vpop.f32.mrf.mxu0
      %v851 = vadd.f32 %v790, %v850
      %852 = vmatmul.bf16.gmra.mxu0 %v515
      %v853 = vpop.f32.mrf.mxu0
      %v854 = vadd.f32 %v790, %v853
      %v855 = vpop.f32.mrf.mxu0
      %v856 = vadd.f32 %v790, %v855
      %857 = vmatmul.bf16.gmra.mxu0 %v518
      %v858 = vpop.f32.mrf.mxu0
      %v859 = vadd.f32 %v790, %v858
      %v860 = vpop.f32.mrf.mxu0
      %v861 = vadd.f32 %v790, %v860
      %862 = vmatmul.bf16.gmra.mxu0 %v521
      %v863 = vpop.f32.mrf.mxu0
      %v864 = vadd.f32 %v790, %v863
      %v865 = vpop.f32.mrf.mxu0
      %v866 = vadd.f32 %v790, %v865
      %867 = vmatmul.bf16.gmra.mxu0 %v524
      %v868 = vpop.f32.mrf.mxu0
      %v869 = vadd.f32 %v790, %v868
      %v870 = vpop.f32.mrf.mxu0
      %v871 = vadd.f32 %v790, %v870
      %872 = vmatmul.bf16.gmra.mxu0 %v527
      %v873 = vpop.f32.mrf.mxu0
      %v874 = vadd.f32 %v790, %v873
      %v875 = vpop.f32.mrf.mxu0
      %v876 = vadd.f32 %v790, %v875
      %877 = vmatmul.bf16.gmra.mxu0 %v530
      %v878 = vpop.f32.mrf.mxu0
      %v879 = vadd.f32 %v790, %v878
      %v880 = vpop.f32.mrf.mxu0
      %v881 = vadd.f32 %v790, %v880
      %882 = vmatmul.bf16.gmra.mxu0 %v533
      %v883 = vpop.f32.mrf.mxu0
      %v884 = vadd.f32 %v790, %v883
      %v885 = vpop.f32.mrf.mxu0
      %v886 = vadd.f32 %v790, %v885
      %887 = vdwg.mxu0
      %vm888 = vcmask 523264
      %889 = vst.msk [vmem:[%s361] sm:$0xff] %vm888, %v814
      %890 = vst.msk [vmem:[%s361 + $0x8] sm:$0xff] %vm888, %v816
      %891 = vst.msk [vmem:[%s361 + $0x10] sm:$0xff] %vm888, %v819
      %892 = vst.msk [vmem:[%s361 + $0x18] sm:$0xff] %vm888, %v821
      %893 = vst.msk [vmem:[%s361 + $0x20] sm:$0xff] %vm888, %v824
      %894 = vst.msk [vmem:[%s361 + $0x28] sm:$0xff] %vm888, %v826
      %895 = vst.msk [vmem:[%s361 + $0x30] sm:$0xff] %vm888, %v829
      %896 = vst.msk [vmem:[%s361 + $0x38] sm:$0xff] %vm888, %v831
      %897 = vst.msk [vmem:[%s361 + $0x40] sm:$0xff] %vm888, %v834
      %898 = vst.msk [vmem:[%s361 + $0x48] sm:$0xff] %vm888, %v836
      %899 = vst.msk [vmem:[%s361 + $0x50] sm:$0xff] %vm888, %v839
      %900 = vst.msk [vmem:[%s361 + $0x58] sm:$0xff] %vm888, %v841
      %901 = vst.msk [vmem:[%s361 + $0x60] sm:$0xff] %vm888, %v844
      %902 = vst.msk [vmem:[%s361 + $0x68] sm:$0xff] %vm888, %v846
      %903 = vst.msk [vmem:[%s361 + $0x70] sm:$0xff] %vm888, %v849
      %904 = vst.msk [vmem:[%s361 + $0x78] sm:$0xff] %vm888, %v851
      %905 = vst.msk [vmem:[%s361 + $0x80] sm:$0xff] %vm888, %v854
      %906 = vst.msk [vmem:[%s361 + $0x88] sm:$0xff] %vm888, %v856
      %907 = vst.msk [vmem:[%s361 + $0x90] sm:$0xff] %vm888, %v859
      %908 = vst.msk [vmem:[%s361 + $0x98] sm:$0xff] %vm888, %v861
      %909 = vst.msk [vmem:[%s361 + $0xa0] sm:$0xff] %vm888, %v864
      %910 = vst.msk [vmem:[%s361 + $0xa8] sm:$0xff] %vm888, %v866
      %911 = vst.msk [vmem:[%s361 + $0xb0] sm:$0xff] %vm888, %v869
      %912 = vst.msk [vmem:[%s361 + $0xb8] sm:$0xff] %vm888, %v871
      %913 = vst.msk [vmem:[%s361 + $0xc0] sm:$0xff] %vm888, %v874
      %914 = vst.msk [vmem:[%s361 + $0xc8] sm:$0xff] %vm888, %v876
      %915 = vst.msk [vmem:[%s361 + $0xd0] sm:$0xff] %vm888, %v879
      %916 = vst.msk [vmem:[%s361 + $0xd8] sm:$0xff] %vm888, %v881
      %917 = vst.msk [vmem:[%s361 + $0xe0] sm:$0xff] %vm888, %v884
      %918 = vst.msk [vmem:[%s361 + $0xe8] sm:$0xff] %vm888, %v886
      %s919 = smul.u32 30, %s21
      %p920 = scmp.lt.s32.totalorder %s919, 59
      %s921 = scalar_select %p920, %s919, 59
      %s922 = smul.addr %s921, 8
      %s923 = scalar_lea.vmem %s7, %s922
      %s924 = smul.u32 30, %s21
      %p925 = scmp.lt.s32.totalorder %s924, 59
      %s926 = scalar_select %p925, %s924, 59
      %s927 = smul.addr %s926, 8
      %s928 = scalar_lea.vmem %s8, %s927
      %s929 = smul.u32 30, %s21
      %p930 = scmp.lt.s32.totalorder %s929, 59
      %s931 = scalar_select %p930, %s929, 59
      %s932 = smul.addr %s931, 8
      %s933 = scalar_lea.vmem %s9, %s932
      // Predicated region
      $region49: #{tpu_custom_call.1} parent=47 // pred_check
        %p934 = pneg %p191
      $region50: #{tpu_custom_call.1} parent=47 // pred_check_branch
        %936 = sbr.rel (%p934) target = $region52
      $region51: #{tpu_custom_call.1} parent=47 // pred_region
        %s937 = smul.u32 30, %s21
      $region52: #{tpu_custom_call.1} parent=47 // pred_fallthru
        _
      // Predicated region
      $region53: #{tpu_custom_call.1} parent=47 // pred_check
        %p938 = pneg %p217
      $region54: #{tpu_custom_call.1} parent=47 // pred_check_branch
        %940 = sbr.rel (%p938) target = $region56
      $region55: #{tpu_custom_call.1} parent=47 // pred_region
        %s941 = smul.u32 30, %s21
      $region56: #{tpu_custom_call.1} parent=47 // pred_fallthru
        _
      // Predicated region
      $region57: #{tpu_custom_call.1} parent=47 // pred_check
        %p942 = pneg %p243
      $region58: #{tpu_custom_call.1} parent=47 // pred_check_branch
        %944 = sbr.rel (%p942) target = $region60
      $region59: #{tpu_custom_call.1} parent=47 // pred_region
        %s945 = smul.u32 30, %s21
      $region60: #{tpu_custom_call.1} parent=47 // pred_fallthru
        _
    $region48: #{tpu_custom_call.1} parent=5 // pred_fallthru
      _
    %p946 = scmp.le.s32.totalorder 2, %s16
    // Predicated region
    $region61: #{tpu_custom_call.1} parent=5 // pred_check
      %p947 = pneg %p946
    $region62: #{tpu_custom_call.1} parent=5 // pred_check_branch
      %949 = sbr.rel (%p947) target = $region64
    $region63: #{tpu_custom_call.1} parent=5 // pred_region
      %s950 = ssub.s32 %s16, 2
      // Predicated region
      $region65: #{tpu_custom_call.1} parent=63 // pred_check
        %p951 = pneg %p197
      $region66: #{tpu_custom_call.1} parent=63 // pred_check_branch
        %953 = sbr.rel (%p951) target = $region68
      $region67: #{tpu_custom_call.1} parent=63 // pred_region
        %s954 = smul.u32 30, %s22
        %p955 = scmp.lt.s32.totalorder %s954, 59
        %s956 = scalar_select %p955, %s954, 59
        %s957 = smul.addr %s956, 8
        %s958 = scalar_lea.vmem %s7, %s957
      $region68: #{tpu_custom_call.1} parent=63 // pred_fallthru
        _
      // Predicated region
      $region69: #{tpu_custom_call.1} parent=63 // pred_check
        %p959 = pneg %p223
      $region70: #{tpu_custom_call.1} parent=63 // pred_check_branch
        %961 = sbr.rel (%p959) target = $region72
      $region71: #{tpu_custom_call.1} parent=63 // pred_region
        %s962 = smul.u32 30, %s22
        %p963 = scmp.lt.s32.totalorder %s962, 59
        %s964 = scalar_select %p963, %s962, 59
        %s965 = smul.addr %s964, 8
        %s966 = scalar_lea.vmem %s8, %s965
      $region72: #{tpu_custom_call.1} parent=63 // pred_fallthru
        _
      // Predicated region
      $region73: #{tpu_custom_call.1} parent=63 // pred_check
        %p967 = pneg %p249
      $region74: #{tpu_custom_call.1} parent=63 // pred_check_branch
        %969 = sbr.rel (%p967) target = $region76
      $region75: #{tpu_custom_call.1} parent=63 // pred_region
        %s970 = smul.u32 30, %s22
        %p971 = scmp.lt.s32.totalorder %s970, 59
        %s972 = scalar_select %p971, %s970, 59
        %s973 = smul.addr %s972, 8
        %s974 = scalar_lea.vmem %s9, %s973
      $region76: #{tpu_custom_call.1} parent=63 // pred_fallthru
        _
    $region64: #{tpu_custom_call.1} parent=5 // pred_fallthru
      _
  $region6: #{tpu_custom_call.1} parent=0 // loop_footer
    %s20 = sadd.s32 1, %s16
  $region7: #{tpu_custom_call.1} parent=0 // loop_footer_branch
    %15 = sbr.rel target = $region3
  $region8: #{tpu_custom_call.1} parent=0 // loop_exit
    _

</llo_original>
